<compile_context>
chip_gen: v7x
topology: tpu7x:2x2x1
jax: 0.10.0
libtpu: 0.0.40
codegen_flags: <defaults>
</compile_context>

<pallas_src>
import functools

import jax
import jax.numpy as jnp
from jax.experimental import pallas as pl
from jax.experimental.pallas import tpu as pltpu


def _round_up(n, m):
    return ((n + m - 1) // m) * m


# ---------------------------------------------------------------------------
# Fused kernel: 3x3 conv (+bias, ReLU) -> global-average-pool -> classifier.
# Single grid step: everything (input, params, outputs) is VMEM-resident.
# ---------------------------------------------------------------------------
def _fused_kernel(x_ref, w_ref, b_ref, cw_ref, cb_ref, v_ref, y_ref, *, inv_hw):
    B, Hp2, Wp2, C = x_ref.shape
    H, W = Hp2 - 2, Wp2 - 2
    FP = w_ref.shape[-1]                     # lane-padded feature width (128)

    x = x_ref[...]                           # (B, H+2, W+2, C) bf16
    # In-kernel im2col, built once: stack the 9 shifted windows along the last
    # (lane) axis -> lane-dense (B*H*W, 9*C) patch matrix.
    patches = jnp.concatenate(
        [x[:, kh:kh + H, kw:kw + W, :] for kh in range(3) for kw in range(3)],
        axis=-1).reshape(B * H * W, 9 * C)

    # ONE fused-K MXU matmul (K = 9*C), f32 accumulation.
    acc = jnp.dot(patches, w_ref[...], preferred_element_type=jnp.float32)

    feat = jnp.maximum(acc + b_ref[...], 0.0)                 # bias + ReLU, f32
    v = feat.reshape(B, H * W, FP).sum(axis=1) * inv_hw       # GAP, (B, FP) f32
    v_ref[...] = v

    # Classifier over all batches at once (M = B), bf16 operands, f32 acc.
    y_ref[...] = (jnp.dot(v.astype(jnp.bfloat16), cw_ref[...],
                          preferred_element_type=jnp.float32)
                  + cb_ref[...])                              # (B, NP)


@jax.jit
def _fused_forward(xp, w_pad, b_pad, cw_pad, cb_pad):
    """xp: (B, H+2, W+2, C) bf16 padded NHWC input (no halo duplication)."""
    B, Hp2, Wp2, C = xp.shape
    H, W = Hp2 - 2, Wp2 - 2
    FP = w_pad.shape[-1]
    NP = cw_pad.shape[-1]
    inv_hw = 1.0 / float(H * W)

    kernel = functools.partial(_fused_kernel, inv_hw=inv_hw)

    flops = int(2 * B * H * W * 9 * C * FP + 2 * B * FP * NP)
    bytes_accessed = int(xp.size * 2                     # bf16 input
                         + w_pad.size * 2                # bf16 conv weights
                         + cw_pad.size * 2               # bf16 classifier weights
                         + (b_pad.size + cb_pad.size) * 4
                         + B * (FP + NP) * 4)            # outputs

    # Whole-array (no grid) mapping: all operands fit trivially in VMEM at
    # these shapes, so a single step avoids per-step pipeline overhead.
    v_pad, y_pad = pl.pallas_call(
        kernel,
        out_shape=(jax.ShapeDtypeStruct((B, FP), jnp.float32),
                   jax.ShapeDtypeStruct((B, NP), jnp.float32)),
        compiler_params=pltpu.CompilerParams(
            vmem_limit_bytes=32 * 1024 * 1024),
        cost_estimate=pl.CostEstimate(flops=flops, transcendentals=0,
                                      bytes_accessed=bytes_accessed),
    )(xp, w_pad, b_pad, cw_pad, cb_pad)

    return v_pad, y_pad


# ---------------------------------------------------------------------------
# Model wrapper mirroring TorchVisionModel
# ---------------------------------------------------------------------------
class TorchVisionModelPallas:
    def __init__(self, num_classes, loss, in_channels=4, feature_dim=32,
                 seed=0):
        self.loss = loss
        self.training = True
        self.feature_dim = feature_dim
        self.num_classes = num_classes
        self.in_channels = in_channels

        k = 3
        kk = k * k * in_channels                 # fused contraction depth, 9*C
        key = jax.random.PRNGKey(seed)
        k1, k2, k3, k4 = jax.random.split(key, 4)
        conv_w = (jax.random.normal(k1, (kk, feature_dim), jnp.float32)
                  * (1.0 / jnp.sqrt(float(kk))))          # rows ordered (kh,kw,c)
        conv_b = jax.random.normal(k2, (feature_dim,), jnp.float32) * 0.01
        cls_w = (jax.random.normal(k3, (feature_dim, num_classes), jnp.float32)
                 * (1.0 / jnp.sqrt(float(feature_dim))))
        cls_b = jax.random.normal(k4, (num_classes,), jnp.float32) * 0.01

        FP = _round_up(feature_dim, 128)         # lane-dense feature width
        NP = _round_up(num_classes, 128)         # lane-dense logits width

        # Conv weight as a single (9*C, FP) bf16 operand for the fused-K matmul.
        self.w_pad = (jnp.zeros((kk, FP), jnp.float32)
                      .at[:, :feature_dim].set(conv_w)).astype(jnp.bfloat16)
        self.b_pad = (jnp.zeros((1, FP), jnp.float32)
                      .at[0, :feature_dim].set(conv_b))
        # Classifier weight in bf16 (MXU operand), bias in f32.
        self.cw_pad = (jnp.zeros((FP, NP), jnp.float32)
                       .at[:feature_dim, :num_classes].set(cls_w)
                       ).astype(jnp.bfloat16)
        self.cb_pad = (jnp.zeros((1, NP), jnp.float32)
                       .at[0, :num_classes].set(cls_b))

    def _features_and_logits(self, x_nchw):
        # NCHW -> NHWC, bf16, and pad=1 only (no halo-duplicated copies).
        x = jnp.transpose(x_nchw, (0, 2, 3, 1)).astype(jnp.bfloat16)
        xp = jnp.pad(x, ((0, 0), (1, 1), (1, 1), (0, 0)))
        v_pad, y_pad = _fused_forward(xp, self.w_pad, self.b_pad,
                                      self.cw_pad, self.cb_pad)
        return v_pad[:, :self.feature_dim], y_pad[:, :self.num_classes]

    def forward(self, x):
        v, y = self._features_and_logits(x)
        if not self.training:
            return v
        if self.loss == {'xent'}:
            return y
        elif self.loss == {'xent', 'htri'}:
            return (y, v)
        else:
            raise KeyError(f'Unsupported loss: {self.loss}')

    __call__ = forward


# ---------------------------------------------------------------------------
if __name__ == "__main__":
    B, C, H, W = 2, 4, 16, 16
    num_classes = 8

    key = jax.random.PRNGKey(0)
    x = jax.random.normal(key, (B, C, H, W), jnp.float32)   # PyTorch NCHW input

    model = TorchVisionModelPallas(num_classes=num_classes,
                                   loss={'xent', 'htri'},
                                   in_channels=C,
                                   feature_dim=32,
                                   seed=0)

    # training mode, loss={'xent','htri'} -> (logits, features)
    y, v = model(x)
    jax.block_until_ready((y, v))
    assert y.shape == (B, num_classes)
    assert v.shape == (B, model.feature_dim)

    # plain-JAX reference of the same synthetic backbone for validation
    def reference(x_nchw):
        xh = (jnp.transpose(x_nchw, (0, 2, 3, 1))
              .astype(jnp.bfloat16).astype(jnp.float32))
        xpad = jnp.pad(xh, ((0, 0), (1, 1), (1, 1), (0, 0)))
        Bs, Hs, Ws, Cs = xh.shape
        patches = jnp.concatenate(
            [xpad[:, kh:kh + Hs, kw:kw + Ws, :]
             for kh in range(3) for kw in range(3)],
            axis=-1).reshape(Bs * Hs * Ws, 9 * Cs)
        w = model.w_pad.astype(jnp.float32)
        out = jnp.dot(patches, w, precision=jax.lax.Precision.HIGHEST)
        feat = jnp.maximum(out + model.b_pad, 0.0)
        v_r = feat.reshape(Bs, Hs * Ws, -1).mean(axis=1)
        y_r = (jnp.dot(v_r.astype(jnp.bfloat16).astype(jnp.float32),
                       model.cw_pad.astype(jnp.float32),
                       precision=jax.lax.Precision.HIGHEST)
               + model.cb_pad)
        return (v_r[:, :model.feature_dim], y_r[:, :model.num_classes])

    v_ref, y_ref = reference(x)
    assert jnp.allclose(v, v_ref, atol=1e-2, rtol=1e-2)
    assert jnp.allclose(y, y_ref, atol=1e-2, rtol=1e-2)

    # loss={'xent'} -> logits only
    model.loss = {'xent'}
    y_only = model(x)
    jax.block_until_ready(y_only)
    assert y_only.shape == (B, num_classes)

    # eval mode -> features only
    model.training = False
    v_eval = model(x)
    jax.block_until_ready(v_eval)
    assert v_eval.shape == (B, model.feature_dim)

    print("KERNEL_OK")
</pallas_src>

<mosaic_0001>
module attributes {stable_mosaic.version = 11 : i64} {
  func.func @_fused_kernel(%arg0: memref<2x18x18x4xbf16, #tpu.memory_space<vmem>>, %arg1: memref<36x128xbf16, #tpu.memory_space<vmem>>, %arg2: memref<1x128xf32, #tpu.memory_space<vmem>>, %arg3: memref<128x128xbf16, #tpu.memory_space<vmem>>, %arg4: memref<1x128xf32, #tpu.memory_space<vmem>>, %arg5: memref<2x128xf32, #tpu.memory_space<vmem>>, %arg6: memref<2x128xf32, #tpu.memory_space<vmem>>) attributes {dimension_semantics = [], scalar_prefetch = 0 : i64, scratch_operands = 0 : i64, tpu.core_type = #tpu.core_type<tc>} {
    %c0 = arith.constant 0 : index
    %c0_0 = arith.constant 0 : index
    %c0_1 = arith.constant 0 : index
    %c0_2 = arith.constant 0 : index
    %0 = vector.load %arg0[%c0, %c0_0, %c0_1, %c0_2] : memref<2x18x18x4xbf16, #tpu.memory_space<vmem>>, vector<2x18x18x4xbf16>
    %1 = vector.extract_strided_slice %0 {offsets = [0, 0, 0, 0], sizes = [2, 16, 16, 4], strides = [1, 1, 1, 1]} : vector<2x18x18x4xbf16> to vector<2x16x16x4xbf16>
    %2 = vector.extract_strided_slice %0 {offsets = [0, 0, 1, 0], sizes = [2, 16, 16, 4], strides = [1, 1, 1, 1]} : vector<2x18x18x4xbf16> to vector<2x16x16x4xbf16>
    %3 = vector.extract_strided_slice %0 {offsets = [0, 0, 2, 0], sizes = [2, 16, 16, 4], strides = [1, 1, 1, 1]} : vector<2x18x18x4xbf16> to vector<2x16x16x4xbf16>
    %4 = vector.extract_strided_slice %0 {offsets = [0, 1, 0, 0], sizes = [2, 16, 16, 4], strides = [1, 1, 1, 1]} : vector<2x18x18x4xbf16> to vector<2x16x16x4xbf16>
    %5 = vector.extract_strided_slice %0 {offsets = [0, 1, 1, 0], sizes = [2, 16, 16, 4], strides = [1, 1, 1, 1]} : vector<2x18x18x4xbf16> to vector<2x16x16x4xbf16>
    %6 = vector.extract_strided_slice %0 {offsets = [0, 1, 2, 0], sizes = [2, 16, 16, 4], strides = [1, 1, 1, 1]} : vector<2x18x18x4xbf16> to vector<2x16x16x4xbf16>
    %7 = vector.extract_strided_slice %0 {offsets = [0, 2, 0, 0], sizes = [2, 16, 16, 4], strides = [1, 1, 1, 1]} : vector<2x18x18x4xbf16> to vector<2x16x16x4xbf16>
    %8 = vector.extract_strided_slice %0 {offsets = [0, 2, 1, 0], sizes = [2, 16, 16, 4], strides = [1, 1, 1, 1]} : vector<2x18x18x4xbf16> to vector<2x16x16x4xbf16>
    %9 = vector.extract_strided_slice %0 {offsets = [0, 2, 2, 0], sizes = [2, 16, 16, 4], strides = [1, 1, 1, 1]} : vector<2x18x18x4xbf16> to vector<2x16x16x4xbf16>
    %10 = tpu.concatenate %1, %2, %3, %4, %5, %6, %7, %8, %9 in 3 : vector<2x16x16x4xbf16>, vector<2x16x16x4xbf16>, vector<2x16x16x4xbf16>, vector<2x16x16x4xbf16>, vector<2x16x16x4xbf16>, vector<2x16x16x4xbf16>, vector<2x16x16x4xbf16>, vector<2x16x16x4xbf16>, vector<2x16x16x4xbf16> -> vector<2x16x16x36xbf16>
    %11 = vector.shape_cast %10 : vector<2x16x16x36xbf16> to vector<512x36xbf16>
    %c0_3 = arith.constant 0 : index
    %c0_4 = arith.constant 0 : index
    %12 = vector.load %arg1[%c0_3, %c0_4] : memref<36x128xbf16, #tpu.memory_space<vmem>>, vector<36x128xbf16>
    %cst = arith.constant dense<0.000000e+00> : vector<512x128xf32>
    %13 = tpu.matmul %11, %12, %cst {dimension_numbers = #tpu.dot_dimension_numbers<[1], [0], [0], [1], [0, 0, 1, 1], [], []>} : vector<512x36xbf16>, vector<36x128xbf16>, vector<512x128xf32> -> vector<512x128xf32>
    %c0_5 = arith.constant 0 : index
    %c0_6 = arith.constant 0 : index
    %14 = vector.load %arg2[%c0_5, %c0_6] : memref<1x128xf32, #tpu.memory_space<vmem>>, vector<1x128xf32>
    %15 = vector.broadcast %14 : vector<1x128xf32> to vector<512x128xf32>
    %16 = arith.addf %13, %15 : vector<512x128xf32>
    %cst_7 = arith.constant 0.000000e+00 : f32
    %17 = vector.broadcast %cst_7 : f32 to vector<512x128xf32>
    %18 = arith.maximumf %16, %17 : vector<512x128xf32>
    %19 = vector.shape_cast %18 : vector<512x128xf32> to vector<2x256x128xf32>
    %cst_8 = arith.constant dense<0.000000e+00> : vector<2x128xf32>
    %20 = vector.multi_reduction <add>, %19, %cst_8 [1] : vector<2x256x128xf32> to vector<2x128xf32>
    %cst_9 = arith.constant 3.906250e-03 : f32
    %21 = vector.broadcast %cst_9 : f32 to vector<2x128xf32>
    %22 = arith.mulf %20, %21 : vector<2x128xf32>
    %c0_10 = arith.constant 0 : index
    %c0_11 = arith.constant 0 : index
    %23 = vector.load %arg5[%c0_10, %c0_11] : memref<2x128xf32, #tpu.memory_space<vmem>>, vector<2x128xf32>
    tpu.vector_store %arg5[%c0_10, %c0_11], %22 {strides = array<i32>} : memref<2x128xf32, #tpu.memory_space<vmem>>, vector<2x128xf32>,
    %24 = arith.truncf %22 : vector<2x128xf32> to vector<2x128xbf16>
    %c0_12 = arith.constant 0 : index
    %c0_13 = arith.constant 0 : index
    %25 = vector.load %arg3[%c0_12, %c0_13] : memref<128x128xbf16, #tpu.memory_space<vmem>>, vector<128x128xbf16>
    %cst_14 = arith.constant dense<0.000000e+00> : vector<2x128xf32>
    %26 = tpu.matmul %24, %25, %cst_14 {dimension_numbers = #tpu.dot_dimension_numbers<[1], [0], [0], [1], [0, 0, 1, 1], [], []>} : vector<2x128xbf16>, vector<128x128xbf16>, vector<2x128xf32> -> vector<2x128xf32>
    %c0_15 = arith.constant 0 : index
    %c0_16 = arith.constant 0 : index
    %27 = vector.load %arg4[%c0_15, %c0_16] : memref<1x128xf32, #tpu.memory_space<vmem>>, vector<1x128xf32>
    %28 = vector.broadcast %27 : vector<1x128xf32> to vector<2x128xf32>
    %29 = arith.addf %26, %28 : vector<2x128xf32>
    %c0_17 = arith.constant 0 : index
    %c0_18 = arith.constant 0 : index
    %30 = vector.load %arg6[%c0_17, %c0_18] : memref<2x128xf32, #tpu.memory_space<vmem>>, vector<2x128xf32>
    tpu.vector_store %arg6[%c0_17, %c0_18], %29 {strides = array<i32>} : memref<2x128xf32, #tpu.memory_space<vmem>>, vector<2x128xf32>,
    return
  }
}

</mosaic_0001>

<llo_original>
// kernel: _fused_forward.1
$region0: #{_fused_forward.1}
  #allocation0 [shape = 'u32[]', space=smem, size = 0x4, offset = 0x4, fixed_abs, tag = 'smem constant byte address 0x4 - core index']
  #allocation1 [shape = 'u32[144,128]{1,0:T(1,128)}', space=vmem, size = 0x12000, scoped, tag = 'internal scratch']
  %s0 = inlined_call_operand.vmem [shape: bf16[2,18,18,4], index: 0, kind: input, shape index: {}]
  %s1 = inlined_call_operand.vmem [shape: bf16[36,128], index: 1, kind: input, shape index: {}]
  %s2 = inlined_call_operand.vmem [shape: f32[1,128], index: 2, kind: input, shape index: {}]
  %s3 = inlined_call_operand.vmem [shape: bf16[128,128], index: 3, kind: input, shape index: {}]
  %s4 = inlined_call_operand.vmem [shape: f32[1,128], index: 4, kind: input, shape index: {}]
  %s5 = inlined_call_operand.hbm [shape: f32[2,128], index: 5, kind: output, shape index: {0}]
  %s6 = inlined_call_operand.hbm [shape: f32[2,128], index: 6, kind: output, shape index: {1}]
  %7 = xla_tuple %s5, %s6
  %s8 = sld [smem:[#allocation0]]
  $region38: #{_fused_forward.1} parent=0
    _
  %s10 = ssub.s32 1, %s8
  %s11 = scalar_select 0, %s10, %s8
  $region1: #{_fused_forward.1} parent=0
    #allocation2 [shape = 'u8[1024]{0}', space=vmem, size = 0x400, scoped, tag = 'output window, operand 0, single buffered']
    #allocation3 [shape = 's32[1]{0}', space=sflag, size = 0x4, scoped, tag = 'scoped memory for _fused_forward.1']
    #allocation4 [shape = 'u8[1024]{0}', space=vmem, size = 0x400, scoped, tag = 'output window, operand 1, single buffered']
    #allocation5 [shape = 's32[1]{0}', space=sflag, size = 0x4, scoped, tag = 'scoped memory for _fused_forward.1']
    %12 = vsyncpa [#allocation3], 0
    %13 = vsyncpa [#allocation5], 0
    // Predicated region
    $region2: #{_fused_forward.1} parent=1 // pred_check
      _
    $region3: #{_fused_forward.1} parent=1 // pred_check_branch
      %15 = sbr.rel (0) target = $region5
    $region4: #{_fused_forward.1} parent=1 // pred_region
      _
    $region5: #{_fused_forward.1} parent=1 // pred_fallthru
      _
    // Predicated region
    $region6: #{_fused_forward.1} parent=1 // pred_check
      _
    $region7: #{_fused_forward.1} parent=1 // pred_check_branch
      %17 = sbr.rel (0) target = $region9
    $region8: #{_fused_forward.1} parent=1 // pred_region
      _
    $region9: #{_fused_forward.1} parent=1 // pred_fallthru
      _
    // Predicated region
    $region10: #{_fused_forward.1} parent=1 // pred_check
      _
    $region11: #{_fused_forward.1} parent=1 // pred_check_branch
      %19 = sbr.rel (0) target = $region13
    $region12: #{_fused_forward.1} parent=1 // pred_region
      _
    $region13: #{_fused_forward.1} parent=1 // pred_fallthru
      _
    // Predicated region
    $region14: #{_fused_forward.1} parent=1 // pred_check
      _
    $region15: #{_fused_forward.1} parent=1 // pred_check_branch
      %21 = sbr.rel (0) target = $region17
    $region16: #{_fused_forward.1} parent=1 // pred_region
      _
    $region17: #{_fused_forward.1} parent=1 // pred_fallthru
      _
    // Predicated region
    $region18: #{_fused_forward.1} parent=1 // pred_check
      _
    $region19: #{_fused_forward.1} parent=1 // pred_check_branch
      %23 = sbr.rel (0) target = $region21
    $region20: #{_fused_forward.1} parent=1 // pred_region
      _
    $region21: #{_fused_forward.1} parent=1 // pred_fallthru
      _
    %v25 = vld [vmem:[%s0] sm:$0xf]
    %v26 = vld [vmem:[%s0 + $0x4] sm:$0xf]
    %v27 = vld [vmem:[%s0 + $0x8] sm:$0x1]
    %v28 = vld [vmem:[%s0 + $0xc] sm:$0xf]
    %v29 = vld [vmem:[%s0 + $0x10] sm:$0xf]
    %v30 = vld [vmem:[%s0 + $0x14] sm:$0x1]
    %v31 = vld [vmem:[%s0 + $0x18] sm:$0xf]
    %v32 = vld [vmem:[%s0 + $0x1c] sm:$0xf]
    %v33 = vld [vmem:[%s0 + $0x20] sm:$0x1]
    %v34 = vld [vmem:[%s0 + $0x24] sm:$0xf]
    %v35 = vld [vmem:[%s0 + $0x28] sm:$0xf]
    %v36 = vld [vmem:[%s0 + $0x2c] sm:$0x1]
    %v37 = vld [vmem:[%s0 + $0x30] sm:$0xf]
    %v38 = vld [vmem:[%s0 + $0x34] sm:$0xf]
    %v39 = vld [vmem:[%s0 + $0x38] sm:$0x1]
    %v40 = vld [vmem:[%s0 + $0x3c] sm:$0xf]
    %v41 = vld [vmem:[%s0 + $0x40] sm:$0xf]
    %v42 = vld [vmem:[%s0 + $0x44] sm:$0x1]
    %v43 = vld [vmem:[%s0 + $0x48] sm:$0xf]
    %v44 = vld [vmem:[%s0 + $0x4c] sm:$0xf]
    %v45 = vld [vmem:[%s0 + $0x50] sm:$0x1]
    %v46 = vld [vmem:[%s0 + $0x54] sm:$0xf]
    %v47 = vld [vmem:[%s0 + $0x58] sm:$0xf]
    %v48 = vld [vmem:[%s0 + $0x5c] sm:$0x1]
    %v49 = vld [vmem:[%s0 + $0x60] sm:$0xf]
    %v50 = vld [vmem:[%s0 + $0x64] sm:$0xf]
    %v51 = vld [vmem:[%s0 + $0x68] sm:$0x1]
    %v52 = vld [vmem:[%s0 + $0x6c] sm:$0xf]
    %v53 = vld [vmem:[%s0 + $0x70] sm:$0xf]
    %v54 = vld [vmem:[%s0 + $0x74] sm:$0x1]
    %v55 = vld [vmem:[%s0 + $0x78] sm:$0xf]
    %v56 = vld [vmem:[%s0 + $0x7c] sm:$0xf]
    %v57 = vld [vmem:[%s0 + $0x80] sm:$0x1]
    %v58 = vld [vmem:[%s0 + $0x84] sm:$0xf]
    %v59 = vld [vmem:[%s0 + $0x88] sm:$0xf]
    %v60 = vld [vmem:[%s0 + $0x8c] sm:$0x1]
    %v61 = vld [vmem:[%s0 + $0x90] sm:$0xf]
    %v62 = vld [vmem:[%s0 + $0x94] sm:$0xf]
    %v63 = vld [vmem:[%s0 + $0x98] sm:$0x1]
    %v64 = vld [vmem:[%s0 + $0x9c] sm:$0xf]
    %v65 = vld [vmem:[%s0 + $0xa0] sm:$0xf]
    %v66 = vld [vmem:[%s0 + $0xa4] sm:$0x1]
    %v67 = vld [vmem:[%s0 + $0xa8] sm:$0xf]
    %v68 = vld [vmem:[%s0 + $0xac] sm:$0xf]
    %v69 = vld [vmem:[%s0 + $0xb0] sm:$0x1]
    %v70 = vld [vmem:[%s0 + $0xb4] sm:$0xf]
    %v71 = vld [vmem:[%s0 + $0xb8] sm:$0xf]
    %v72 = vld [vmem:[%s0 + $0xbc] sm:$0x1]
    %v73 = vld [vmem:[%s0 + $0xc0] sm:$0xf]
    %v74 = vld [vmem:[%s0 + $0xc4] sm:$0xf]
    %v75 = vld [vmem:[%s0 + $0xc8] sm:$0x1]
    %v76 = vld [vmem:[%s0 + $0xcc] sm:$0xf]
    %v77 = vld [vmem:[%s0 + $0xd0] sm:$0xf]
    %v78 = vld [vmem:[%s0 + $0xd4] sm:$0x1]
    %v79 = vld [vmem:[%s0 + $0xd8] sm:$0xf]
    %v80 = vld [vmem:[%s0 + $0xdc] sm:$0xf]
    %v81 = vld [vmem:[%s0 + $0xe0] sm:$0x1]
    %v82 = vld [vmem:[%s0 + $0xe4] sm:$0xf]
    %v83 = vld [vmem:[%s0 + $0xe8] sm:$0xf]
    %v84 = vld [vmem:[%s0 + $0xec] sm:$0x1]
    %v85 = vld [vmem:[%s0 + $0xf0] sm:$0xf]
    %v86 = vld [vmem:[%s0 + $0xf4] sm:$0xf]
    %v87 = vld [vmem:[%s0 + $0xf8] sm:$0x1]
    %v88 = vld [vmem:[%s0 + $0xfc] sm:$0xf]
    %v89 = vld [vmem:[%s0 + $0x100] sm:$0xf]
    %v90 = vld [vmem:[%s0 + $0x104] sm:$0x1]
    %v91 = vld [vmem:[%s0 + $0x108] sm:$0xf]
    %v92 = vld [vmem:[%s0 + $0x10c] sm:$0xf]
    %v93 = vld [vmem:[%s0 + $0x110] sm:$0x1]
    %v94 = vld [vmem:[%s0 + $0x114] sm:$0xf]
    %v95 = vld [vmem:[%s0 + $0x118] sm:$0xf]
    %v96 = vld [vmem:[%s0 + $0x11c] sm:$0x1]
    %v97 = vld [vmem:[%s0 + $0x120] sm:$0xf]
    %v98 = vld [vmem:[%s0 + $0x124] sm:$0xf]
    %v99 = vld [vmem:[%s0 + $0x128] sm:$0x1]
    %v100 = vld [vmem:[%s0 + $0x12c] sm:$0xf]
    %v101 = vld [vmem:[%s0 + $0x130] sm:$0xf]
    %v102 = vld [vmem:[%s0 + $0x134] sm:$0x1]
    %v103 = vld [vmem:[%s0 + $0x138] sm:$0xf]
    %v104 = vld [vmem:[%s0 + $0x13c] sm:$0xf]
    %v105 = vld [vmem:[%s0 + $0x140] sm:$0x1]
    %v106 = vld [vmem:[%s0 + $0x144] sm:$0xf]
    %v107 = vld [vmem:[%s0 + $0x148] sm:$0xf]
    %v108 = vld [vmem:[%s0 + $0x14c] sm:$0x1]
    %v109 = vld [vmem:[%s0 + $0x150] sm:$0xf]
    %v110 = vld [vmem:[%s0 + $0x154] sm:$0xf]
    %v111 = vld [vmem:[%s0 + $0x158] sm:$0x1]
    %v112 = vld [vmem:[%s0 + $0x15c] sm:$0xf]
    %v113 = vld [vmem:[%s0 + $0x160] sm:$0xf]
    %v114 = vld [vmem:[%s0 + $0x164] sm:$0x1]
    %v115 = vld [vmem:[%s0 + $0x168] sm:$0xf]
    %v116 = vld [vmem:[%s0 + $0x16c] sm:$0xf]
    %v117 = vld [vmem:[%s0 + $0x170] sm:$0x1]
    %v118 = vld [vmem:[%s0 + $0x174] sm:$0xf]
    %v119 = vld [vmem:[%s0 + $0x178] sm:$0xf]
    %v120 = vld [vmem:[%s0 + $0x17c] sm:$0x1]
    %v121 = vld [vmem:[%s0 + $0x180] sm:$0xf]
    %v122 = vld [vmem:[%s0 + $0x184] sm:$0xf]
    %v123 = vld [vmem:[%s0 + $0x188] sm:$0x1]
    %v124 = vld [vmem:[%s0 + $0x18c] sm:$0xf]
    %v125 = vld [vmem:[%s0 + $0x190] sm:$0xf]
    %v126 = vld [vmem:[%s0 + $0x194] sm:$0x1]
    %v127 = vld [vmem:[%s0 + $0x198] sm:$0xf]
    %v128 = vld [vmem:[%s0 + $0x19c] sm:$0xf]
    %v129 = vld [vmem:[%s0 + $0x1a0] sm:$0x1]
    %v130 = vld [vmem:[%s0 + $0x1a4] sm:$0xf]
    %v131 = vld [vmem:[%s0 + $0x1a8] sm:$0xf]
    %v132 = vld [vmem:[%s0 + $0x1ac] sm:$0x1]
    %v197 = vunpack.c.l.b16 %v25
    %v198 = vunpack.c.l.b16 %v26
    %v199 = vunpack.c.l.b16 %v28
    %v200 = vunpack.c.l.b16 %v29
    %v201 = vunpack.c.l.b16 %v31
    %v202 = vunpack.c.l.b16 %v32
    %v203 = vunpack.c.l.b16 %v34
    %v204 = vunpack.c.l.b16 %v35
    %v205 = vunpack.c.l.b16 %v37
    %v206 = vunpack.c.l.b16 %v38
    %v207 = vunpack.c.l.b16 %v40
    %v208 = vunpack.c.l.b16 %v41
    %v209 = vunpack.c.l.b16 %v43
    %v210 = vunpack.c.l.b16 %v44
    %v211 = vunpack.c.l.b16 %v46
    %v212 = vunpack.c.l.b16 %v47
    %v213 = vunpack.c.l.b16 %v49
    %v214 = vunpack.c.l.b16 %v50
    %v215 = vunpack.c.l.b16 %v52
    %v216 = vunpack.c.l.b16 %v53
    %v217 = vunpack.c.l.b16 %v55
    %v218 = vunpack.c.l.b16 %v56
    %v219 = vunpack.c.l.b16 %v58
    %v220 = vunpack.c.l.b16 %v59
    %v221 = vunpack.c.l.b16 %v61
    %v222 = vunpack.c.l.b16 %v62
    %v223 = vunpack.c.l.b16 %v64
    %v224 = vunpack.c.l.b16 %v65
    %v225 = vunpack.c.l.b16 %v67
    %v226 = vunpack.c.l.b16 %v68
    %v227 = vunpack.c.l.b16 %v70
    %v228 = vunpack.c.l.b16 %v71
    %v229 = vunpack.c.l.b16 %v79
    %v230 = vunpack.c.l.b16 %v80
    %v231 = vunpack.c.l.b16 %v82
    %v232 = vunpack.c.l.b16 %v83
    %v233 = vunpack.c.l.b16 %v85
    %v234 = vunpack.c.l.b16 %v86
    %v235 = vunpack.c.l.b16 %v88
    %v236 = vunpack.c.l.b16 %v89
    %v237 = vunpack.c.l.b16 %v91
    %v238 = vunpack.c.l.b16 %v92
    %v239 = vunpack.c.l.b16 %v94
    %v240 = vunpack.c.l.b16 %v95
    %v241 = vunpack.c.l.b16 %v97
    %v242 = vunpack.c.l.b16 %v98
    %v243 = vunpack.c.l.b16 %v100
    %v244 = vunpack.c.l.b16 %v101
    %v245 = vunpack.c.l.b16 %v103
    %v246 = vunpack.c.l.b16 %v104
    %v247 = vunpack.c.l.b16 %v106
    %v248 = vunpack.c.l.b16 %v107
    %v249 = vunpack.c.l.b16 %v109
    %v250 = vunpack.c.l.b16 %v110
    %v251 = vunpack.c.l.b16 %v112
    %v252 = vunpack.c.l.b16 %v113
    %v253 = vunpack.c.l.b16 %v115
    %v254 = vunpack.c.l.b16 %v116
    %v255 = vunpack.c.l.b16 %v118
    %v256 = vunpack.c.l.b16 %v119
    %v257 = vunpack.c.l.b16 %v121
    %v258 = vunpack.c.l.b16 %v122
    %v259 = vunpack.c.l.b16 %v124
    %v260 = vunpack.c.l.b16 %v125
    %v261 = vpack.c.b16 %v198, %v197
    %v262 = vpack.c.b16 %v200, %v199
    %v263 = vpack.c.b16 %v202, %v201
    %v264 = vpack.c.b16 %v204, %v203
    %v265 = vpack.c.b16 %v206, %v205
    %v266 = vpack.c.b16 %v208, %v207
    %v267 = vpack.c.b16 %v210, %v209
    %v268 = vpack.c.b16 %v212, %v211
    %v269 = vpack.c.b16 %v214, %v213
    %v270 = vpack.c.b16 %v216, %v215
    %v271 = vpack.c.b16 %v218, %v217
    %v272 = vpack.c.b16 %v220, %v219
    %v273 = vpack.c.b16 %v222, %v221
    %v274 = vpack.c.b16 %v224, %v223
    %v275 = vpack.c.b16 %v226, %v225
    %v276 = vpack.c.b16 %v228, %v227
    %v277 = vpack.c.b16 %v230, %v229
    %v278 = vpack.c.b16 %v232, %v231
    %v279 = vpack.c.b16 %v234, %v233
    %v280 = vpack.c.b16 %v236, %v235
    %v281 = vpack.c.b16 %v238, %v237
    %v282 = vpack.c.b16 %v240, %v239
    %v283 = vpack.c.b16 %v242, %v241
    %v284 = vpack.c.b16 %v244, %v243
    %v285 = vpack.c.b16 %v246, %v245
    %v286 = vpack.c.b16 %v248, %v247
    %v287 = vpack.c.b16 %v250, %v249
    %v288 = vpack.c.b16 %v252, %v251
    %v289 = vpack.c.b16 %v254, %v253
    %v290 = vpack.c.b16 %v256, %v255
    %v291 = vpack.c.b16 %v258, %v257
    %v292 = vpack.c.b16 %v260, %v259
    %v325 = vunpack.c.l.b16 %v27
    %v326 = vunpack.c.l.b16 %v30
    %v327 = vunpack.c.l.b16 %v33
    %v328 = vunpack.c.l.b16 %v36
    %v329 = vunpack.c.l.b16 %v39
    %v330 = vunpack.c.l.b16 %v42
    %v331 = vunpack.c.l.b16 %v45
    %v332 = vunpack.c.l.b16 %v48
    %v333 = vunpack.c.l.b16 %v51
    %v334 = vunpack.c.l.b16 %v54
    %v335 = vunpack.c.l.b16 %v57
    %v336 = vunpack.c.l.b16 %v60
    %v337 = vunpack.c.l.b16 %v63
    %v338 = vunpack.c.l.b16 %v66
    %v339 = vunpack.c.l.b16 %v69
    %v340 = vunpack.c.l.b16 %v72
    %v341 = vunpack.c.l.b16 %v81
    %v342 = vunpack.c.l.b16 %v84
    %v343 = vunpack.c.l.b16 %v87
    %v344 = vunpack.c.l.b16 %v90
    %v345 = vunpack.c.l.b16 %v93
    %v346 = vunpack.c.l.b16 %v96
    %v347 = vunpack.c.l.b16 %v99
    %v348 = vunpack.c.l.b16 %v102
    %v349 = vunpack.c.l.b16 %v105
    %v350 = vunpack.c.l.b16 %v108
    %v351 = vunpack.c.l.b16 %v111
    %v352 = vunpack.c.l.b16 %v114
    %v353 = vunpack.c.l.b16 %v117
    %v354 = vunpack.c.l.b16 %v120
    %v355 = vunpack.c.l.b16 %v123
    %v356 = vunpack.c.l.b16 %v126
    %v357 = vpack.c.b16 %v325, %v325
    %v358 = vpack.c.b16 %v326, %v326
    %v359 = vpack.c.b16 %v327, %v327
    %v360 = vpack.c.b16 %v328, %v328
    %v361 = vpack.c.b16 %v329, %v329
    %v362 = vpack.c.b16 %v330, %v330
    %v363 = vpack.c.b16 %v331, %v331
    %v364 = vpack.c.b16 %v332, %v332
    %v365 = vpack.c.b16 %v333, %v333
    %v366 = vpack.c.b16 %v334, %v334
    %v367 = vpack.c.b16 %v335, %v335
    %v368 = vpack.c.b16 %v336, %v336
    %v369 = vpack.c.b16 %v337, %v337
    %v370 = vpack.c.b16 %v338, %v338
    %v371 = vpack.c.b16 %v339, %v339
    %v372 = vpack.c.b16 %v340, %v340
    %v373 = vpack.c.b16 %v341, %v341
    %v374 = vpack.c.b16 %v342, %v342
    %v375 = vpack.c.b16 %v343, %v343
    %v376 = vpack.c.b16 %v344, %v344
    %v377 = vpack.c.b16 %v345, %v345
    %v378 = vpack.c.b16 %v346, %v346
    %v379 = vpack.c.b16 %v347, %v347
    %v380 = vpack.c.b16 %v348, %v348
    %v381 = vpack.c.b16 %v349, %v349
    %v382 = vpack.c.b16 %v350, %v350
    %v383 = vpack.c.b16 %v351, %v351
    %v384 = vpack.c.b16 %v352, %v352
    %v385 = vpack.c.b16 %v353, %v353
    %v386 = vpack.c.b16 %v354, %v354
    %v387 = vpack.c.b16 %v355, %v355
    %v388 = vpack.c.b16 %v356, %v356
    %vm389 = vsmask.f32 7424
    %v391 = vshrl.u32 %v261, 16
    %v393 = vshll.u32 %v261, 16
    %v395 = vrot.slane %v393, 1
    %v396 = vor.u32 %v391, %v395
    %v398 = vshll.u32 %v357, 16
    %v400 = vrot.slane %v398, 1
    %v401 = vsel %vm389, %v396, %v400
    %v403 = vshrl.u32 %v262, 16
    %v405 = vshll.u32 %v262, 16
    %v407 = vrot.slane %v405, 1
    %v408 = vor.u32 %v403, %v407
    %v410 = vshll.u32 %v358, 16
    %v412 = vrot.slane %v410, 1
    %v413 = vsel %vm389, %v408, %v412
    %v415 = vshrl.u32 %v263, 16
    %v417 = vshll.u32 %v263, 16
    %v419 = vrot.slane %v417, 1
    %v420 = vor.u32 %v415, %v419
    %v422 = vshll.u32 %v359, 16
    %v424 = vrot.slane %v422, 1
    %v425 = vsel %vm389, %v420, %v424
    %v427 = vshrl.u32 %v264, 16
    %v429 = vshll.u32 %v264, 16
    %v431 = vrot.slane %v429, 1
    %v432 = vor.u32 %v427, %v431
    %v434 = vshll.u32 %v360, 16
    %v436 = vrot.slane %v434, 1
    %v437 = vsel %vm389, %v432, %v436
    %v439 = vshrl.u32 %v265, 16
    %v441 = vshll.u32 %v265, 16
    %v443 = vrot.slane %v441, 1
    %v444 = vor.u32 %v439, %v443
    %v446 = vshll.u32 %v361, 16
    %v448 = vrot.slane %v446, 1
    %v449 = vsel %vm389, %v444, %v448
    %v451 = vshrl.u32 %v266, 16
    %v453 = vshll.u32 %v266, 16
    %v455 = vrot.slane %v453, 1
    %v456 = vor.u32 %v451, %v455
    %v458 = vshll.u32 %v362, 16
    %v460 = vrot.slane %v458, 1
    %v461 = vsel %vm389, %v456, %v460
    %v463 = vshrl.u32 %v267, 16
    %v465 = vshll.u32 %v267, 16
    %v467 = vrot.slane %v465, 1
    %v468 = vor.u32 %v463, %v467
    %v470 = vshll.u32 %v363, 16
    %v472 = vrot.slane %v470, 1
    %v473 = vsel %vm389, %v468, %v472
    %v475 = vshrl.u32 %v268, 16
    %v477 = vshll.u32 %v268, 16
    %v479 = vrot.slane %v477, 1
    %v480 = vor.u32 %v475, %v479
    %v482 = vshll.u32 %v364, 16
    %v484 = vrot.slane %v482, 1
    %v485 = vsel %vm389, %v480, %v484
    %v487 = vshrl.u32 %v269, 16
    %v489 = vshll.u32 %v269, 16
    %v491 = vrot.slane %v489, 1
    %v492 = vor.u32 %v487, %v491
    %v494 = vshll.u32 %v365, 16
    %v496 = vrot.slane %v494, 1
    %v497 = vsel %vm389, %v492, %v496
    %v499 = vshrl.u32 %v270, 16
    %v501 = vshll.u32 %v270, 16
    %v503 = vrot.slane %v501, 1
    %v504 = vor.u32 %v499, %v503
    %v506 = vshll.u32 %v366, 16
    %v508 = vrot.slane %v506, 1
    %v509 = vsel %vm389, %v504, %v508
    %v511 = vshrl.u32 %v271, 16
    %v513 = vshll.u32 %v271, 16
    %v515 = vrot.slane %v513, 1
    %v516 = vor.u32 %v511, %v515
    %v518 = vshll.u32 %v367, 16
    %v520 = vrot.slane %v518, 1
    %v521 = vsel %vm389, %v516, %v520
    %v523 = vshrl.u32 %v272, 16
    %v525 = vshll.u32 %v272, 16
    %v527 = vrot.slane %v525, 1
    %v528 = vor.u32 %v523, %v527
    %v530 = vshll.u32 %v368, 16
    %v532 = vrot.slane %v530, 1
    %v533 = vsel %vm389, %v528, %v532
    %v535 = vshrl.u32 %v273, 16
    %v537 = vshll.u32 %v273, 16
    %v539 = vrot.slane %v537, 1
    %v540 = vor.u32 %v535, %v539
    %v542 = vshll.u32 %v369, 16
    %v544 = vrot.slane %v542, 1
    %v545 = vsel %vm389, %v540, %v544
    %v547 = vshrl.u32 %v274, 16
    %v549 = vshll.u32 %v274, 16
    %v551 = vrot.slane %v549, 1
    %v552 = vor.u32 %v547, %v551
    %v554 = vshll.u32 %v370, 16
    %v556 = vrot.slane %v554, 1
    %v557 = vsel %vm389, %v552, %v556
    %v559 = vshrl.u32 %v275, 16
    %v561 = vshll.u32 %v275, 16
    %v563 = vrot.slane %v561, 1
    %v564 = vor.u32 %v559, %v563
    %v566 = vshll.u32 %v371, 16
    %v568 = vrot.slane %v566, 1
    %v569 = vsel %vm389, %v564, %v568
    %v571 = vshrl.u32 %v276, 16
    %v573 = vshll.u32 %v276, 16
    %v575 = vrot.slane %v573, 1
    %v576 = vor.u32 %v571, %v575
    %v578 = vshll.u32 %v372, 16
    %v580 = vrot.slane %v578, 1
    %v581 = vsel %vm389, %v576, %v580
    %v583 = vshrl.u32 %v277, 16
    %v585 = vshll.u32 %v277, 16
    %v587 = vrot.slane %v585, 1
    %v588 = vor.u32 %v583, %v587
    %v590 = vshll.u32 %v373, 16
    %v592 = vrot.slane %v590, 1
    %v593 = vsel %vm389, %v588, %v592
    %v595 = vshrl.u32 %v278, 16
    %v597 = vshll.u32 %v278, 16
    %v599 = vrot.slane %v597, 1
    %v600 = vor.u32 %v595, %v599
    %v602 = vshll.u32 %v374, 16
    %v604 = vrot.slane %v602, 1
    %v605 = vsel %vm389, %v600, %v604
    %v607 = vshrl.u32 %v279, 16
    %v609 = vshll.u32 %v279, 16
    %v611 = vrot.slane %v609, 1
    %v612 = vor.u32 %v607, %v611
    %v614 = vshll.u32 %v375, 16
    %v616 = vrot.slane %v614, 1
    %v617 = vsel %vm389, %v612, %v616
    %v619 = vshrl.u32 %v280, 16
    %v621 = vshll.u32 %v280, 16
    %v623 = vrot.slane %v621, 1
    %v624 = vor.u32 %v619, %v623
    %v626 = vshll.u32 %v376, 16
    %v628 = vrot.slane %v626, 1
    %v629 = vsel %vm389, %v624, %v628
    %v631 = vshrl.u32 %v281, 16
    %v633 = vshll.u32 %v281, 16
    %v635 = vrot.slane %v633, 1
    %v636 = vor.u32 %v631, %v635
    %v638 = vshll.u32 %v377, 16
    %v640 = vrot.slane %v638, 1
    %v641 = vsel %vm389, %v636, %v640
    %v643 = vshrl.u32 %v282, 16
    %v645 = vshll.u32 %v282, 16
    %v647 = vrot.slane %v645, 1
    %v648 = vor.u32 %v643, %v647
    %v650 = vshll.u32 %v378, 16
    %v652 = vrot.slane %v650, 1
    %v653 = vsel %vm389, %v648, %v652
    %v655 = vshrl.u32 %v283, 16
    %v657 = vshll.u32 %v283, 16
    %v659 = vrot.slane %v657, 1
    %v660 = vor.u32 %v655, %v659
    %v662 = vshll.u32 %v379, 16
    %v664 = vrot.slane %v662, 1
    %v665 = vsel %vm389, %v660, %v664
    %v667 = vshrl.u32 %v284, 16
    %v669 = vshll.u32 %v284, 16
    %v671 = vrot.slane %v669, 1
    %v672 = vor.u32 %v667, %v671
    %v674 = vshll.u32 %v380, 16
    %v676 = vrot.slane %v674, 1
    %v677 = vsel %vm389, %v672, %v676
    %v679 = vshrl.u32 %v285, 16
    %v681 = vshll.u32 %v285, 16
    %v683 = vrot.slane %v681, 1
    %v684 = vor.u32 %v679, %v683
    %v686 = vshll.u32 %v381, 16
    %v688 = vrot.slane %v686, 1
    %v689 = vsel %vm389, %v684, %v688
    %v691 = vshrl.u32 %v286, 16
    %v693 = vshll.u32 %v286, 16
    %v695 = vrot.slane %v693, 1
    %v696 = vor.u32 %v691, %v695
    %v698 = vshll.u32 %v382, 16
    %v700 = vrot.slane %v698, 1
    %v701 = vsel %vm389, %v696, %v700
    %v703 = vshrl.u32 %v287, 16
    %v705 = vshll.u32 %v287, 16
    %v707 = vrot.slane %v705, 1
    %v708 = vor.u32 %v703, %v707
    %v710 = vshll.u32 %v383, 16
    %v712 = vrot.slane %v710, 1
    %v713 = vsel %vm389, %v708, %v712
    %v715 = vshrl.u32 %v288, 16
    %v717 = vshll.u32 %v288, 16
    %v719 = vrot.slane %v717, 1
    %v720 = vor.u32 %v715, %v719
    %v722 = vshll.u32 %v384, 16
    %v724 = vrot.slane %v722, 1
    %v725 = vsel %vm389, %v720, %v724
    %v727 = vshrl.u32 %v289, 16
    %v729 = vshll.u32 %v289, 16
    %v731 = vrot.slane %v729, 1
    %v732 = vor.u32 %v727, %v731
    %v734 = vshll.u32 %v385, 16
    %v736 = vrot.slane %v734, 1
    %v737 = vsel %vm389, %v732, %v736
    %v739 = vshrl.u32 %v290, 16
    %v741 = vshll.u32 %v290, 16
    %v743 = vrot.slane %v741, 1
    %v744 = vor.u32 %v739, %v743
    %v746 = vshll.u32 %v386, 16
    %v748 = vrot.slane %v746, 1
    %v749 = vsel %vm389, %v744, %v748
    %v751 = vshrl.u32 %v291, 16
    %v753 = vshll.u32 %v291, 16
    %v755 = vrot.slane %v753, 1
    %v756 = vor.u32 %v751, %v755
    %v758 = vshll.u32 %v387, 16
    %v760 = vrot.slane %v758, 1
    %v761 = vsel %vm389, %v756, %v760
    %v763 = vshrl.u32 %v292, 16
    %v765 = vshll.u32 %v292, 16
    %v767 = vrot.slane %v765, 1
    %v768 = vor.u32 %v763, %v767
    %v770 = vshll.u32 %v388, 16
    %v772 = vrot.slane %v770, 1
    %v773 = vsel %vm389, %v768, %v772
    %774 = vrot.lane.b32.xlu0 %v401, 4
    %v775 = vpop.permute.xlu0 %774
    %776 = vrot.lane.b32.xlu0 %v413, 4
    %v777 = vpop.permute.xlu0 %776
    %778 = vrot.lane.b32.xlu0 %v425, 4
    %v779 = vpop.permute.xlu0 %778
    %780 = vrot.lane.b32.xlu0 %v437, 4
    %v781 = vpop.permute.xlu0 %780
    %782 = vrot.lane.b32.xlu0 %v449, 4
    %v783 = vpop.permute.xlu0 %782
    %784 = vrot.lane.b32.xlu0 %v461, 4
    %v785 = vpop.permute.xlu0 %784
    %786 = vrot.lane.b32.xlu0 %v473, 4
    %v787 = vpop.permute.xlu0 %786
    %788 = vrot.lane.b32.xlu0 %v485, 4
    %v789 = vpop.permute.xlu0 %788
    %790 = vrot.lane.b32.xlu0 %v497, 4
    %v791 = vpop.permute.xlu0 %790
    %792 = vrot.lane.b32.xlu0 %v509, 4
    %v793 = vpop.permute.xlu0 %792
    %794 = vrot.lane.b32.xlu0 %v521, 4
    %v795 = vpop.permute.xlu0 %794
    %796 = vrot.lane.b32.xlu0 %v533, 4
    %v797 = vpop.permute.xlu0 %796
    %798 = vrot.lane.b32.xlu0 %v545, 4
    %v799 = vpop.permute.xlu0 %798
    %800 = vrot.lane.b32.xlu0 %v557, 4
    %v801 = vpop.permute.xlu0 %800
    %802 = vrot.lane.b32.xlu0 %v569, 4
    %v803 = vpop.permute.xlu0 %802
    %804 = vrot.lane.b32.xlu0 %v581, 4
    %v805 = vpop.permute.xlu0 %804
    %806 = vrot.lane.b32.xlu0 %v593, 4
    %v807 = vpop.permute.xlu0 %806
    %808 = vrot.lane.b32.xlu0 %v605, 4
    %v809 = vpop.permute.xlu0 %808
    %810 = vrot.lane.b32.xlu0 %v617, 4
    %v811 = vpop.permute.xlu0 %810
    %812 = vrot.lane.b32.xlu0 %v629, 4
    %v813 = vpop.permute.xlu0 %812
    %814 = vrot.lane.b32.xlu0 %v641, 4
    %v815 = vpop.permute.xlu0 %814
    %816 = vrot.lane.b32.xlu0 %v653, 4
    %v817 = vpop.permute.xlu0 %816
    %818 = vrot.lane.b32.xlu0 %v665, 4
    %v819 = vpop.permute.xlu0 %818
    %820 = vrot.lane.b32.xlu0 %v677, 4
    %v821 = vpop.permute.xlu0 %820
    %822 = vrot.lane.b32.xlu0 %v689, 4
    %v823 = vpop.permute.xlu0 %822
    %824 = vrot.lane.b32.xlu0 %v701, 4
    %v825 = vpop.permute.xlu0 %824
    %826 = vrot.lane.b32.xlu0 %v713, 4
    %v827 = vpop.permute.xlu0 %826
    %828 = vrot.lane.b32.xlu0 %v725, 4
    %v829 = vpop.permute.xlu0 %828
    %830 = vrot.lane.b32.xlu0 %v737, 4
    %v831 = vpop.permute.xlu0 %830
    %832 = vrot.lane.b32.xlu0 %v749, 4
    %v833 = vpop.permute.xlu0 %832
    %834 = vrot.lane.b32.xlu0 %v761, 4
    %v835 = vpop.permute.xlu0 %834
    %836 = vrot.lane.b32.xlu0 %v773, 4
    %v837 = vpop.permute.xlu0 %836
    %vm838 = vcmask 1046528
    %v839 = vrot.slane %v261, 1
    %v840 = vrot.slane %v357, 1
    %v841 = vsel %vm838, %v839, %v840
    %v842 = vrot.slane %v262, 1
    %v843 = vrot.slane %v358, 1
    %v844 = vsel %vm838, %v842, %v843
    %v845 = vrot.slane %v263, 1
    %v846 = vrot.slane %v359, 1
    %v847 = vsel %vm838, %v845, %v846
    %v848 = vrot.slane %v264, 1
    %v849 = vrot.slane %v360, 1
    %v850 = vsel %vm838, %v848, %v849
    %v851 = vrot.slane %v265, 1
    %v852 = vrot.slane %v361, 1
    %v853 = vsel %vm838, %v851, %v852
    %v854 = vrot.slane %v266, 1
    %v855 = vrot.slane %v362, 1
    %v856 = vsel %vm838, %v854, %v855
    %v857 = vrot.slane %v267, 1
    %v858 = vrot.slane %v363, 1
    %v859 = vsel %vm838, %v857, %v858
    %v860 = vrot.slane %v268, 1
    %v861 = vrot.slane %v364, 1
    %v862 = vsel %vm838, %v860, %v861
    %v863 = vrot.slane %v269, 1
    %v864 = vrot.slane %v365, 1
    %v865 = vsel %vm838, %v863, %v864
    %v866 = vrot.slane %v270, 1
    %v867 = vrot.slane %v366, 1
    %v868 = vsel %vm838, %v866, %v867
    %v869 = vrot.slane %v271, 1
    %v870 = vrot.slane %v367, 1
    %v871 = vsel %vm838, %v869, %v870
    %v872 = vrot.slane %v272, 1
    %v873 = vrot.slane %v368, 1
    %v874 = vsel %vm838, %v872, %v873
    %v875 = vrot.slane %v273, 1
    %v876 = vrot.slane %v369, 1
    %v877 = vsel %vm838, %v875, %v876
    %v878 = vrot.slane %v274, 1
    %v879 = vrot.slane %v370, 1
    %v880 = vsel %vm838, %v878, %v879
    %v881 = vrot.slane %v275, 1
    %v882 = vrot.slane %v371, 1
    %v883 = vsel %vm838, %v881, %v882
    %v884 = vrot.slane %v276, 1
    %v885 = vrot.slane %v372, 1
    %v886 = vsel %vm838, %v884, %v885
    %v887 = vrot.slane %v277, 1
    %v888 = vrot.slane %v373, 1
    %v889 = vsel %vm838, %v887, %v888
    %v890 = vrot.slane %v278, 1
    %v891 = vrot.slane %v374, 1
    %v892 = vsel %vm838, %v890, %v891
    %v893 = vrot.slane %v279, 1
    %v894 = vrot.slane %v375, 1
    %v895 = vsel %vm838, %v893, %v894
    %v896 = vrot.slane %v280, 1
    %v897 = vrot.slane %v376, 1
    %v898 = vsel %vm838, %v896, %v897
    %v899 = vrot.slane %v281, 1
    %v900 = vrot.slane %v377, 1
    %v901 = vsel %vm838, %v899, %v900
    %v902 = vrot.slane %v282, 1
    %v903 = vrot.slane %v378, 1
    %v904 = vsel %vm838, %v902, %v903
    %v905 = vrot.slane %v283, 1
    %v906 = vrot.slane %v379, 1
    %v907 = vsel %vm838, %v905, %v906
    %v908 = vrot.slane %v284, 1
    %v909 = vrot.slane %v380, 1
    %v910 = vsel %vm838, %v908, %v909
    %v911 = vrot.slane %v285, 1
    %v912 = vrot.slane %v381, 1
    %v913 = vsel %vm838, %v911, %v912
    %v914 = vrot.slane %v286, 1
    %v915 = vrot.slane %v382, 1
    %v916 = vsel %vm838, %v914, %v915
    %v917 = vrot.slane %v287, 1
    %v918 = vrot.slane %v383, 1
    %v919 = vsel %vm838, %v917, %v918
    %v920 = vrot.slane %v288, 1
    %v921 = vrot.slane %v384, 1
    %v922 = vsel %vm838, %v920, %v921
    %v923 = vrot.slane %v289, 1
    %v924 = vrot.slane %v385, 1
    %v925 = vsel %vm838, %v923, %v924
    %v926 = vrot.slane %v290, 1
    %v927 = vrot.slane %v386, 1
    %v928 = vsel %vm838, %v926, %v927
    %v929 = vrot.slane %v291, 1
    %v930 = vrot.slane %v387, 1
    %v931 = vsel %vm838, %v929, %v930
    %v932 = vrot.slane %v292, 1
    %v933 = vrot.slane %v388, 1
    %v934 = vsel %vm838, %v932, %v933
    %935 = vrot.lane.b32.xlu0 %v841, 8
    %v936 = vpop.permute.xlu0 %935
    %937 = vrot.lane.b32.xlu0 %v844, 8
    %v938 = vpop.permute.xlu0 %937
    %939 = vrot.lane.b32.xlu0 %v847, 8
    %v940 = vpop.permute.xlu0 %939
    %941 = vrot.lane.b32.xlu0 %v850, 8
    %v942 = vpop.permute.xlu0 %941
    %943 = vrot.lane.b32.xlu0 %v853, 8
    %v944 = vpop.permute.xlu0 %943
    %945 = vrot.lane.b32.xlu0 %v856, 8
    %v946 = vpop.permute.xlu0 %945
    %947 = vrot.lane.b32.xlu0 %v859, 8
    %v948 = vpop.permute.xlu0 %947
    %949 = vrot.lane.b32.xlu0 %v862, 8
    %v950 = vpop.permute.xlu0 %949
    %951 = vrot.lane.b32.xlu0 %v865, 8
    %v952 = vpop.permute.xlu0 %951
    %953 = vrot.lane.b32.xlu0 %v868, 8
    %v954 = vpop.permute.xlu0 %953
    %955 = vrot.lane.b32.xlu0 %v871, 8
    %v956 = vpop.permute.xlu0 %955
    %957 = vrot.lane.b32.xlu0 %v874, 8
    %v958 = vpop.permute.xlu0 %957
    %959 = vrot.lane.b32.xlu0 %v877, 8
    %v960 = vpop.permute.xlu0 %959
    %961 = vrot.lane.b32.xlu0 %v880, 8
    %v962 = vpop.permute.xlu0 %961
    %963 = vrot.lane.b32.xlu0 %v883, 8
    %v964 = vpop.permute.xlu0 %963
    %965 = vrot.lane.b32.xlu0 %v886, 8
    %v966 = vpop.permute.xlu0 %965
    %967 = vrot.lane.b32.xlu0 %v889, 8
    %v968 = vpop.permute.xlu0 %967
    %969 = vrot.lane.b32.xlu0 %v892, 8
    %v970 = vpop.permute.xlu0 %969
    %971 = vrot.lane.b32.xlu0 %v895, 8
    %v972 = vpop.permute.xlu0 %971
    %973 = vrot.lane.b32.xlu0 %v898, 8
    %v974 = vpop.permute.xlu0 %973
    %975 = vrot.lane.b32.xlu0 %v901, 8
    %v976 = vpop.permute.xlu0 %975
    %977 = vrot.lane.b32.xlu0 %v904, 8
    %v978 = vpop.permute.xlu0 %977
    %979 = vrot.lane.b32.xlu0 %v907, 8
    %v980 = vpop.permute.xlu0 %979
    %981 = vrot.lane.b32.xlu0 %v910, 8
    %v982 = vpop.permute.xlu0 %981
    %983 = vrot.lane.b32.xlu0 %v913, 8
    %v984 = vpop.permute.xlu0 %983
    %985 = vrot.lane.b32.xlu0 %v916, 8
    %v986 = vpop.permute.xlu0 %985
    %987 = vrot.lane.b32.xlu0 %v919, 8
    %v988 = vpop.permute.xlu0 %987
    %989 = vrot.lane.b32.xlu0 %v922, 8
    %v990 = vpop.permute.xlu0 %989
    %991 = vrot.lane.b32.xlu0 %v925, 8
    %v992 = vpop.permute.xlu0 %991
    %993 = vrot.lane.b32.xlu0 %v928, 8
    %v994 = vpop.permute.xlu0 %993
    %995 = vrot.lane.b32.xlu0 %v931, 8
    %v996 = vpop.permute.xlu0 %995
    %997 = vrot.lane.b32.xlu0 %v934, 8
    %v998 = vpop.permute.xlu0 %997
    %v1003 = vunpack.c.l.b16 %v73
    %v1004 = vunpack.c.l.b16 %v74
    %v1005 = vunpack.c.l.b16 %v127
    %v1006 = vunpack.c.l.b16 %v128
    %v1007 = vpack.c.b16 %v1004, %v1003
    %v1008 = vpack.c.b16 %v1006, %v1005
    %1009 = vrot.lane.b32.xlu0 %v262, 12
    %v1010 = vpop.permute.xlu0 %1009
    %1011 = vrot.lane.b32.xlu0 %v263, 12
    %v1012 = vpop.permute.xlu0 %1011
    %1013 = vrot.lane.b32.xlu0 %v264, 12
    %v1014 = vpop.permute.xlu0 %1013
    %1015 = vrot.lane.b32.xlu0 %v265, 12
    %v1016 = vpop.permute.xlu0 %1015
    %1017 = vrot.lane.b32.xlu0 %v266, 12
    %v1018 = vpop.permute.xlu0 %1017
    %1019 = vrot.lane.b32.xlu0 %v267, 12
    %v1020 = vpop.permute.xlu0 %1019
    %1021 = vrot.lane.b32.xlu0 %v268, 12
    %v1022 = vpop.permute.xlu0 %1021
    %1023 = vrot.lane.b32.xlu0 %v269, 12
    %v1024 = vpop.permute.xlu0 %1023
    %1025 = vrot.lane.b32.xlu0 %v270, 12
    %v1026 = vpop.permute.xlu0 %1025
    %1027 = vrot.lane.b32.xlu0 %v271, 12
    %v1028 = vpop.permute.xlu0 %1027
    %1029 = vrot.lane.b32.xlu0 %v272, 12
    %v1030 = vpop.permute.xlu0 %1029
    %1031 = vrot.lane.b32.xlu0 %v273, 12
    %v1032 = vpop.permute.xlu0 %1031
    %1033 = vrot.lane.b32.xlu0 %v274, 12
    %v1034 = vpop.permute.xlu0 %1033
    %1035 = vrot.lane.b32.xlu0 %v275, 12
    %v1036 = vpop.permute.xlu0 %1035
    %1037 = vrot.lane.b32.xlu0 %v276, 12
    %v1038 = vpop.permute.xlu0 %1037
    %1039 = vrot.lane.b32.xlu0 %v1007, 12
    %v1040 = vpop.permute.xlu0 %1039
    %1041 = vrot.lane.b32.xlu0 %v278, 12
    %v1042 = vpop.permute.xlu0 %1041
    %1043 = vrot.lane.b32.xlu0 %v279, 12
    %v1044 = vpop.permute.xlu0 %1043
    %1045 = vrot.lane.b32.xlu0 %v280, 12
    %v1046 = vpop.permute.xlu0 %1045
    %1047 = vrot.lane.b32.xlu0 %v281, 12
    %v1048 = vpop.permute.xlu0 %1047
    %1049 = vrot.lane.b32.xlu0 %v282, 12
    %v1050 = vpop.permute.xlu0 %1049
    %1051 = vrot.lane.b32.xlu0 %v283, 12
    %v1052 = vpop.permute.xlu0 %1051
    %1053 = vrot.lane.b32.xlu0 %v284, 12
    %v1054 = vpop.permute.xlu0 %1053
    %1055 = vrot.lane.b32.xlu0 %v285, 12
    %v1056 = vpop.permute.xlu0 %1055
    %1057 = vrot.lane.b32.xlu0 %v286, 12
    %v1058 = vpop.permute.xlu0 %1057
    %1059 = vrot.lane.b32.xlu0 %v287, 12
    %v1060 = vpop.permute.xlu0 %1059
    %1061 = vrot.lane.b32.xlu0 %v288, 12
    %v1062 = vpop.permute.xlu0 %1061
    %1063 = vrot.lane.b32.xlu0 %v289, 12
    %v1064 = vpop.permute.xlu0 %1063
    %1065 = vrot.lane.b32.xlu0 %v290, 12
    %v1066 = vpop.permute.xlu0 %1065
    %1067 = vrot.lane.b32.xlu0 %v291, 12
    %v1068 = vpop.permute.xlu0 %1067
    %1069 = vrot.lane.b32.xlu0 %v292, 12
    %v1070 = vpop.permute.xlu0 %1069
    %1071 = vrot.lane.b32.xlu0 %v1008, 12
    %v1072 = vpop.permute.xlu0 %1071
    %v1075 = vunpack.c.l.b16 %v75
    %v1076 = vunpack.c.l.b16 %v129
    %v1077 = vpack.c.b16 %v1075, %v1075
    %v1078 = vpack.c.b16 %v1076, %v1076
    %v1080 = vshrl.u32 %v1007, 16
    %v1082 = vshll.u32 %v1007, 16
    %v1084 = vrot.slane %v1082, 1
    %v1085 = vor.u32 %v1080, %v1084
    %v1087 = vshll.u32 %v1077, 16
    %v1089 = vrot.slane %v1087, 1
    %v1090 = vsel %vm389, %v1085, %v1089
    %v1092 = vshrl.u32 %v1008, 16
    %v1094 = vshll.u32 %v1008, 16
    %v1096 = vrot.slane %v1094, 1
    %v1097 = vor.u32 %v1092, %v1096
    %v1099 = vshll.u32 %v1078, 16
    %v1101 = vrot.slane %v1099, 1
    %v1102 = vsel %vm389, %v1097, %v1101
    %1103 = vrot.lane.b32.xlu0 %v413, 16
    %v1104 = vpop.permute.xlu0 %1103
    %1105 = vrot.lane.b32.xlu0 %v425, 16
    %v1106 = vpop.permute.xlu0 %1105
    %1107 = vrot.lane.b32.xlu0 %v437, 16
    %v1108 = vpop.permute.xlu0 %1107
    %1109 = vrot.lane.b32.xlu0 %v449, 16
    %v1110 = vpop.permute.xlu0 %1109
    %1111 = vrot.lane.b32.xlu0 %v461, 16
    %v1112 = vpop.permute.xlu0 %1111
    %1113 = vrot.lane.b32.xlu0 %v473, 16
    %v1114 = vpop.permute.xlu0 %1113
    %1115 = vrot.lane.b32.xlu0 %v485, 16
    %v1116 = vpop.permute.xlu0 %1115
    %1117 = vrot.lane.b32.xlu0 %v497, 16
    %v1118 = vpop.permute.xlu0 %1117
    %1119 = vrot.lane.b32.xlu0 %v509, 16
    %v1120 = vpop.permute.xlu0 %1119
    %1121 = vrot.lane.b32.xlu0 %v521, 16
    %v1122 = vpop.permute.xlu0 %1121
    %1123 = vrot.lane.b32.xlu0 %v533, 16
    %v1124 = vpop.permute.xlu0 %1123
    %1125 = vrot.lane.b32.xlu0 %v545, 16
    %v1126 = vpop.permute.xlu0 %1125
    %1127 = vrot.lane.b32.xlu0 %v557, 16
    %v1128 = vpop.permute.xlu0 %1127
    %1129 = vrot.lane.b32.xlu0 %v569, 16
    %v1130 = vpop.permute.xlu0 %1129
    %1131 = vrot.lane.b32.xlu0 %v581, 16
    %v1132 = vpop.permute.xlu0 %1131
    %1133 = vrot.lane.b32.xlu0 %v1090, 16
    %v1134 = vpop.permute.xlu0 %1133
    %1135 = vrot.lane.b32.xlu0 %v605, 16
    %v1136 = vpop.permute.xlu0 %1135
    %1137 = vrot.lane.b32.xlu0 %v617, 16
    %v1138 = vpop.permute.xlu0 %1137
    %1139 = vrot.lane.b32.xlu0 %v629, 16
    %v1140 = vpop.permute.xlu0 %1139
    %1141 = vrot.lane.b32.xlu0 %v641, 16
    %v1142 = vpop.permute.xlu0 %1141
    %1143 = vrot.lane.b32.xlu0 %v653, 16
    %v1144 = vpop.permute.xlu0 %1143
    %1145 = vrot.lane.b32.xlu0 %v665, 16
    %v1146 = vpop.permute.xlu0 %1145
    %1147 = vrot.lane.b32.xlu0 %v677, 16
    %v1148 = vpop.permute.xlu0 %1147
    %1149 = vrot.lane.b32.xlu0 %v689, 16
    %v1150 = vpop.permute.xlu0 %1149
    %1151 = vrot.lane.b32.xlu0 %v701, 16
    %v1152 = vpop.permute.xlu0 %1151
    %1153 = vrot.lane.b32.xlu0 %v713, 16
    %v1154 = vpop.permute.xlu0 %1153
    %1155 = vrot.lane.b32.xlu0 %v725, 16
    %v1156 = vpop.permute.xlu0 %1155
    %1157 = vrot.lane.b32.xlu0 %v737, 16
    %v1158 = vpop.permute.xlu0 %1157
    %1159 = vrot.lane.b32.xlu0 %v749, 16
    %v1160 = vpop.permute.xlu0 %1159
    %1161 = vrot.lane.b32.xlu0 %v761, 16
    %v1162 = vpop.permute.xlu0 %1161
    %1163 = vrot.lane.b32.xlu0 %v773, 16
    %v1164 = vpop.permute.xlu0 %1163
    %1165 = vrot.lane.b32.xlu0 %v1102, 16
    %v1166 = vpop.permute.xlu0 %1165
    %v1167 = vrot.slane %v1007, 1
    %v1168 = vrot.slane %v1077, 1
    %v1169 = vsel %vm838, %v1167, %v1168
    %v1170 = vrot.slane %v1008, 1
    %v1171 = vrot.slane %v1078, 1
    %v1172 = vsel %vm838, %v1170, %v1171
    %1173 = vrot.lane.b32.xlu0 %v844, 20
    %v1174 = vpop.permute.xlu0 %1173
    %1175 = vrot.lane.b32.xlu0 %v847, 20
    %v1176 = vpop.permute.xlu0 %1175
    %1177 = vrot.lane.b32.xlu0 %v850, 20
    %v1178 = vpop.permute.xlu0 %1177
    %1179 = vrot.lane.b32.xlu0 %v853, 20
    %v1180 = vpop.permute.xlu0 %1179
    %1181 = vrot.lane.b32.xlu0 %v856, 20
    %v1182 = vpop.permute.xlu0 %1181
    %1183 = vrot.lane.b32.xlu0 %v859, 20
    %v1184 = vpop.permute.xlu0 %1183
    %1185 = vrot.lane.b32.xlu0 %v862, 20
    %v1186 = vpop.permute.xlu0 %1185
    %1187 = vrot.lane.b32.xlu0 %v865, 20
    %v1188 = vpop.permute.xlu0 %1187
    %1189 = vrot.lane.b32.xlu0 %v868, 20
    %v1190 = vpop.permute.xlu0 %1189
    %1191 = vrot.lane.b32.xlu0 %v871, 20
    %v1192 = vpop.permute.xlu0 %1191
    %1193 = vrot.lane.b32.xlu0 %v874, 20
    %v1194 = vpop.permute.xlu0 %1193
    %1195 = vrot.lane.b32.xlu0 %v877, 20
    %v1196 = vpop.permute.xlu0 %1195
    %1197 = vrot.lane.b32.xlu0 %v880, 20
    %v1198 = vpop.permute.xlu0 %1197
    %1199 = vrot.lane.b32.xlu0 %v883, 20
    %v1200 = vpop.permute.xlu0 %1199
    %1201 = vrot.lane.b32.xlu0 %v886, 20
    %v1202 = vpop.permute.xlu0 %1201
    %1203 = vrot.lane.b32.xlu0 %v1169, 20
    %v1204 = vpop.permute.xlu0 %1203
    %1205 = vrot.lane.b32.xlu0 %v892, 20
    %v1206 = vpop.permute.xlu0 %1205
    %1207 = vrot.lane.b32.xlu0 %v895, 20
    %v1208 = vpop.permute.xlu0 %1207
    %1209 = vrot.lane.b32.xlu0 %v898, 20
    %v1210 = vpop.permute.xlu0 %1209
    %1211 = vrot.lane.b32.xlu0 %v901, 20
    %v1212 = vpop.permute.xlu0 %1211
    %1213 = vrot.lane.b32.xlu0 %v904, 20
    %v1214 = vpop.permute.xlu0 %1213
    %1215 = vrot.lane.b32.xlu0 %v907, 20
    %v1216 = vpop.permute.xlu0 %1215
    %1217 = vrot.lane.b32.xlu0 %v910, 20
    %v1218 = vpop.permute.xlu0 %1217
    %1219 = vrot.lane.b32.xlu0 %v913, 20
    %v1220 = vpop.permute.xlu0 %1219
    %1221 = vrot.lane.b32.xlu0 %v916, 20
    %v1222 = vpop.permute.xlu0 %1221
    %1223 = vrot.lane.b32.xlu0 %v919, 20
    %v1224 = vpop.permute.xlu0 %1223
    %1225 = vrot.lane.b32.xlu0 %v922, 20
    %v1226 = vpop.permute.xlu0 %1225
    %1227 = vrot.lane.b32.xlu0 %v925, 20
    %v1228 = vpop.permute.xlu0 %1227
    %1229 = vrot.lane.b32.xlu0 %v928, 20
    %v1230 = vpop.permute.xlu0 %1229
    %1231 = vrot.lane.b32.xlu0 %v931, 20
    %v1232 = vpop.permute.xlu0 %1231
    %1233 = vrot.lane.b32.xlu0 %v934, 20
    %v1234 = vpop.permute.xlu0 %1233
    %1235 = vrot.lane.b32.xlu0 %v1172, 20
    %v1236 = vpop.permute.xlu0 %1235
    %v1241 = vunpack.c.l.b16 %v76
    %v1242 = vunpack.c.l.b16 %v77
    %v1243 = vunpack.c.l.b16 %v130
    %v1244 = vunpack.c.l.b16 %v131
    %v1245 = vpack.c.b16 %v1242, %v1241
    %v1246 = vpack.c.b16 %v1244, %v1243
    %1247 = vrot.lane.b32.xlu0 %v263, 24
    %v1248 = vpop.permute.xlu0 %1247
    %1249 = vrot.lane.b32.xlu0 %v264, 24
    %v1250 = vpop.permute.xlu0 %1249
    %1251 = vrot.lane.b32.xlu0 %v265, 24
    %v1252 = vpop.permute.xlu0 %1251
    %1253 = vrot.lane.b32.xlu0 %v266, 24
    %v1254 = vpop.permute.xlu0 %1253
    %1255 = vrot.lane.b32.xlu0 %v267, 24
    %v1256 = vpop.permute.xlu0 %1255
    %1257 = vrot.lane.b32.xlu0 %v268, 24
    %v1258 = vpop.permute.xlu0 %1257
    %1259 = vrot.lane.b32.xlu0 %v269, 24
    %v1260 = vpop.permute.xlu0 %1259
    %1261 = vrot.lane.b32.xlu0 %v270, 24
    %v1262 = vpop.permute.xlu0 %1261
    %1263 = vrot.lane.b32.xlu0 %v271, 24
    %v1264 = vpop.permute.xlu0 %1263
    %1265 = vrot.lane.b32.xlu0 %v272, 24
    %v1266 = vpop.permute.xlu0 %1265
    %1267 = vrot.lane.b32.xlu0 %v273, 24
    %v1268 = vpop.permute.xlu0 %1267
    %1269 = vrot.lane.b32.xlu0 %v274, 24
    %v1270 = vpop.permute.xlu0 %1269
    %1271 = vrot.lane.b32.xlu0 %v275, 24
    %v1272 = vpop.permute.xlu0 %1271
    %1273 = vrot.lane.b32.xlu0 %v276, 24
    %v1274 = vpop.permute.xlu0 %1273
    %1275 = vrot.lane.b32.xlu0 %v1007, 24
    %v1276 = vpop.permute.xlu0 %1275
    %1277 = vrot.lane.b32.xlu0 %v1245, 24
    %v1278 = vpop.permute.xlu0 %1277
    %1279 = vrot.lane.b32.xlu0 %v279, 24
    %v1280 = vpop.permute.xlu0 %1279
    %1281 = vrot.lane.b32.xlu0 %v280, 24
    %v1282 = vpop.permute.xlu0 %1281
    %1283 = vrot.lane.b32.xlu0 %v281, 24
    %v1284 = vpop.permute.xlu0 %1283
    %1285 = vrot.lane.b32.xlu0 %v282, 24
    %v1286 = vpop.permute.xlu0 %1285
    %1287 = vrot.lane.b32.xlu0 %v283, 24
    %v1288 = vpop.permute.xlu0 %1287
    %1289 = vrot.lane.b32.xlu0 %v284, 24
    %v1290 = vpop.permute.xlu0 %1289
    %1291 = vrot.lane.b32.xlu0 %v285, 24
    %v1292 = vpop.permute.xlu0 %1291
    %1293 = vrot.lane.b32.xlu0 %v286, 24
    %v1294 = vpop.permute.xlu0 %1293
    %1295 = vrot.lane.b32.xlu0 %v287, 24
    %v1296 = vpop.permute.xlu0 %1295
    %1297 = vrot.lane.b32.xlu0 %v288, 24
    %v1298 = vpop.permute.xlu0 %1297
    %1299 = vrot.lane.b32.xlu0 %v289, 24
    %v1300 = vpop.permute.xlu0 %1299
    %1301 = vrot.lane.b32.xlu0 %v290, 24
    %v1302 = vpop.permute.xlu0 %1301
    %1303 = vrot.lane.b32.xlu0 %v291, 24
    %v1304 = vpop.permute.xlu0 %1303
    %1305 = vrot.lane.b32.xlu0 %v292, 24
    %v1306 = vpop.permute.xlu0 %1305
    %1307 = vrot.lane.b32.xlu0 %v1008, 24
    %v1308 = vpop.permute.xlu0 %1307
    %1309 = vrot.lane.b32.xlu0 %v1246, 24
    %v1310 = vpop.permute.xlu0 %1309
    %v1313 = vunpack.c.l.b16 %v78
    %v1314 = vunpack.c.l.b16 %v132
    %v1315 = vpack.c.b16 %v1313, %v1313
    %v1316 = vpack.c.b16 %v1314, %v1314
    %v1318 = vshrl.u32 %v1245, 16
    %v1320 = vshll.u32 %v1245, 16
    %v1322 = vrot.slane %v1320, 1
    %v1323 = vor.u32 %v1318, %v1322
    %v1325 = vshll.u32 %v1315, 16
    %v1327 = vrot.slane %v1325, 1
    %v1328 = vsel %vm389, %v1323, %v1327
    %v1330 = vshrl.u32 %v1246, 16
    %v1332 = vshll.u32 %v1246, 16
    %v1334 = vrot.slane %v1332, 1
    %v1335 = vor.u32 %v1330, %v1334
    %v1337 = vshll.u32 %v1316, 16
    %v1339 = vrot.slane %v1337, 1
    %v1340 = vsel %vm389, %v1335, %v1339
    %1341 = vrot.lane.b32.xlu0 %v425, 28
    %v1342 = vpop.permute.xlu0 %1341
    %1343 = vrot.lane.b32.xlu0 %v437, 28
    %v1344 = vpop.permute.xlu0 %1343
    %1345 = vrot.lane.b32.xlu0 %v449, 28
    %v1346 = vpop.permute.xlu0 %1345
    %1347 = vrot.lane.b32.xlu0 %v461, 28
    %v1348 = vpop.permute.xlu0 %1347
    %1349 = vrot.lane.b32.xlu0 %v473, 28
    %v1350 = vpop.permute.xlu0 %1349
    %1351 = vrot.lane.b32.xlu0 %v485, 28
    %v1352 = vpop.permute.xlu0 %1351
    %1353 = vrot.lane.b32.xlu0 %v497, 28
    %v1354 = vpop.permute.xlu0 %1353
    %1355 = vrot.lane.b32.xlu0 %v509, 28
    %v1356 = vpop.permute.xlu0 %1355
    %1357 = vrot.lane.b32.xlu0 %v521, 28
    %v1358 = vpop.permute.xlu0 %1357
    %1359 = vrot.lane.b32.xlu0 %v533, 28
    %v1360 = vpop.permute.xlu0 %1359
    %1361 = vrot.lane.b32.xlu0 %v545, 28
    %v1362 = vpop.permute.xlu0 %1361
    %1363 = vrot.lane.b32.xlu0 %v557, 28
    %v1364 = vpop.permute.xlu0 %1363
    %1365 = vrot.lane.b32.xlu0 %v569, 28
    %v1366 = vpop.permute.xlu0 %1365
    %1367 = vrot.lane.b32.xlu0 %v581, 28
    %v1368 = vpop.permute.xlu0 %1367
    %1369 = vrot.lane.b32.xlu0 %v1090, 28
    %v1370 = vpop.permute.xlu0 %1369
    %1371 = vrot.lane.b32.xlu0 %v1328, 28
    %v1372 = vpop.permute.xlu0 %1371
    %1373 = vrot.lane.b32.xlu0 %v617, 28
    %v1374 = vpop.permute.xlu0 %1373
    %1375 = vrot.lane.b32.xlu0 %v629, 28
    %v1376 = vpop.permute.xlu0 %1375
    %1377 = vrot.lane.b32.xlu0 %v641, 28
    %v1378 = vpop.permute.xlu0 %1377
    %1379 = vrot.lane.b32.xlu0 %v653, 28
    %v1380 = vpop.permute.xlu0 %1379
    %1381 = vrot.lane.b32.xlu0 %v665, 28
    %v1382 = vpop.permute.xlu0 %1381
    %1383 = vrot.lane.b32.xlu0 %v677, 28
    %v1384 = vpop.permute.xlu0 %1383
    %1385 = vrot.lane.b32.xlu0 %v689, 28
    %v1386 = vpop.permute.xlu0 %1385
    %1387 = vrot.lane.b32.xlu0 %v701, 28
    %v1388 = vpop.permute.xlu0 %1387
    %1389 = vrot.lane.b32.xlu0 %v713, 28
    %v1390 = vpop.permute.xlu0 %1389
    %1391 = vrot.lane.b32.xlu0 %v725, 28
    %v1392 = vpop.permute.xlu0 %1391
    %1393 = vrot.lane.b32.xlu0 %v737, 28
    %v1394 = vpop.permute.xlu0 %1393
    %1395 = vrot.lane.b32.xlu0 %v749, 28
    %v1396 = vpop.permute.xlu0 %1395
    %1397 = vrot.lane.b32.xlu0 %v761, 28
    %v1398 = vpop.permute.xlu0 %1397
    %1399 = vrot.lane.b32.xlu0 %v773, 28
    %v1400 = vpop.permute.xlu0 %1399
    %1401 = vrot.lane.b32.xlu0 %v1102, 28
    %v1402 = vpop.permute.xlu0 %1401
    %1403 = vrot.lane.b32.xlu0 %v1340, 28
    %v1404 = vpop.permute.xlu0 %1403
    %v1405 = vrot.slane %v1245, 1
    %v1406 = vrot.slane %v1315, 1
    %v1407 = vsel %vm838, %v1405, %v1406
    %v1408 = vrot.slane %v1246, 1
    %v1409 = vrot.slane %v1316, 1
    %v1410 = vsel %vm838, %v1408, %v1409
    %1411 = vrot.lane.b32.xlu0 %v847, 32
    %v1412 = vpop.permute.xlu0 %1411
    %1413 = vrot.lane.b32.xlu0 %v850, 32
    %v1414 = vpop.permute.xlu0 %1413
    %1415 = vrot.lane.b32.xlu0 %v853, 32
    %v1416 = vpop.permute.xlu0 %1415
    %1417 = vrot.lane.b32.xlu0 %v856, 32
    %v1418 = vpop.permute.xlu0 %1417
    %1419 = vrot.lane.b32.xlu0 %v859, 32
    %v1420 = vpop.permute.xlu0 %1419
    %1421 = vrot.lane.b32.xlu0 %v862, 32
    %v1422 = vpop.permute.xlu0 %1421
    %1423 = vrot.lane.b32.xlu0 %v865, 32
    %v1424 = vpop.permute.xlu0 %1423
    %1425 = vrot.lane.b32.xlu0 %v868, 32
    %v1426 = vpop.permute.xlu0 %1425
    %1427 = vrot.lane.b32.xlu0 %v871, 32
    %v1428 = vpop.permute.xlu0 %1427
    %1429 = vrot.lane.b32.xlu0 %v874, 32
    %v1430 = vpop.permute.xlu0 %1429
    %1431 = vrot.lane.b32.xlu0 %v877, 32
    %v1432 = vpop.permute.xlu0 %1431
    %1433 = vrot.lane.b32.xlu0 %v880, 32
    %v1434 = vpop.permute.xlu0 %1433
    %1435 = vrot.lane.b32.xlu0 %v883, 32
    %v1436 = vpop.permute.xlu0 %1435
    %1437 = vrot.lane.b32.xlu0 %v886, 32
    %v1438 = vpop.permute.xlu0 %1437
    %1439 = vrot.lane.b32.xlu0 %v1169, 32
    %v1440 = vpop.permute.xlu0 %1439
    %1441 = vrot.lane.b32.xlu0 %v1407, 32
    %v1442 = vpop.permute.xlu0 %1441
    %1443 = vrot.lane.b32.xlu0 %v895, 32
    %v1444 = vpop.permute.xlu0 %1443
    %1445 = vrot.lane.b32.xlu0 %v898, 32
    %v1446 = vpop.permute.xlu0 %1445
    %1447 = vrot.lane.b32.xlu0 %v901, 32
    %v1448 = vpop.permute.xlu0 %1447
    %1449 = vrot.lane.b32.xlu0 %v904, 32
    %v1450 = vpop.permute.xlu0 %1449
    %1451 = vrot.lane.b32.xlu0 %v907, 32
    %v1452 = vpop.permute.xlu0 %1451
    %1453 = vrot.lane.b32.xlu0 %v910, 32
    %v1454 = vpop.permute.xlu0 %1453
    %1455 = vrot.lane.b32.xlu0 %v913, 32
    %v1456 = vpop.permute.xlu0 %1455
    %1457 = vrot.lane.b32.xlu0 %v916, 32
    %v1458 = vpop.permute.xlu0 %1457
    %1459 = vrot.lane.b32.xlu0 %v919, 32
    %v1460 = vpop.permute.xlu0 %1459
    %1461 = vrot.lane.b32.xlu0 %v922, 32
    %v1462 = vpop.permute.xlu0 %1461
    %1463 = vrot.lane.b32.xlu0 %v925, 32
    %v1464 = vpop.permute.xlu0 %1463
    %1465 = vrot.lane.b32.xlu0 %v928, 32
    %v1466 = vpop.permute.xlu0 %1465
    %1467 = vrot.lane.b32.xlu0 %v931, 32
    %v1468 = vpop.permute.xlu0 %1467
    %1469 = vrot.lane.b32.xlu0 %v934, 32
    %v1470 = vpop.permute.xlu0 %1469
    %1471 = vrot.lane.b32.xlu0 %v1172, 32
    %v1472 = vpop.permute.xlu0 %1471
    %1473 = vrot.lane.b32.xlu0 %v1410, 32
    %v1474 = vpop.permute.xlu0 %1473
    %vm1475 = vcmask 31744
    %v1477 = vsel %vm1475, %v261, %v775
    %v1479 = vsel %vm1475, %v262, %v777
    %v1481 = vsel %vm1475, %v263, %v779
    %v1483 = vsel %vm1475, %v264, %v781
    %v1485 = vsel %vm1475, %v265, %v783
    %v1487 = vsel %vm1475, %v266, %v785
    %v1489 = vsel %vm1475, %v267, %v787
    %v1491 = vsel %vm1475, %v268, %v789
    %v1493 = vsel %vm1475, %v269, %v791
    %v1495 = vsel %vm1475, %v270, %v793
    %v1497 = vsel %vm1475, %v271, %v795
    %v1499 = vsel %vm1475, %v272, %v797
    %v1501 = vsel %vm1475, %v273, %v799
    %v1503 = vsel %vm1475, %v274, %v801
    %v1505 = vsel %vm1475, %v275, %v803
    %v1507 = vsel %vm1475, %v276, %v805
    %v1509 = vsel %vm1475, %v277, %v807
    %v1511 = vsel %vm1475, %v278, %v809
    %v1513 = vsel %vm1475, %v279, %v811
    %v1515 = vsel %vm1475, %v280, %v813
    %v1517 = vsel %vm1475, %v281, %v815
    %v1519 = vsel %vm1475, %v282, %v817
    %v1521 = vsel %vm1475, %v283, %v819
    %v1523 = vsel %vm1475, %v284, %v821
    %v1525 = vsel %vm1475, %v285, %v823
    %v1527 = vsel %vm1475, %v286, %v825
    %v1529 = vsel %vm1475, %v287, %v827
    %v1531 = vsel %vm1475, %v288, %v829
    %v1533 = vsel %vm1475, %v289, %v831
    %v1535 = vsel %vm1475, %v290, %v833
    %v1537 = vsel %vm1475, %v291, %v835
    %v1539 = vsel %vm1475, %v292, %v837
    %vm1540 = vcmask 64512
    %v1542 = vsel %vm1540, %v1477, %v936
    %v1544 = vsel %vm1540, %v1479, %v938
    %v1546 = vsel %vm1540, %v1481, %v940
    %v1548 = vsel %vm1540, %v1483, %v942
    %v1550 = vsel %vm1540, %v1485, %v944
    %v1552 = vsel %vm1540, %v1487, %v946
    %v1554 = vsel %vm1540, %v1489, %v948
    %v1556 = vsel %vm1540, %v1491, %v950
    %v1558 = vsel %vm1540, %v1493, %v952
    %v1560 = vsel %vm1540, %v1495, %v954
    %v1562 = vsel %vm1540, %v1497, %v956
    %v1564 = vsel %vm1540, %v1499, %v958
    %v1566 = vsel %vm1540, %v1501, %v960
    %v1568 = vsel %vm1540, %v1503, %v962
    %v1570 = vsel %vm1540, %v1505, %v964
    %v1572 = vsel %vm1540, %v1507, %v966
    %v1574 = vsel %vm1540, %v1509, %v968
    %v1576 = vsel %vm1540, %v1511, %v970
    %v1578 = vsel %vm1540, %v1513, %v972
    %v1580 = vsel %vm1540, %v1515, %v974
    %v1582 = vsel %vm1540, %v1517, %v976
    %v1584 = vsel %vm1540, %v1519, %v978
    %v1586 = vsel %vm1540, %v1521, %v980
    %v1588 = vsel %vm1540, %v1523, %v982
    %v1590 = vsel %vm1540, %v1525, %v984
    %v1592 = vsel %vm1540, %v1527, %v986
    %v1594 = vsel %vm1540, %v1529, %v988
    %v1596 = vsel %vm1540, %v1531, %v990
    %v1598 = vsel %vm1540, %v1533, %v992
    %v1600 = vsel %vm1540, %v1535, %v994
    %v1602 = vsel %vm1540, %v1537, %v996
    %v1604 = vsel %vm1540, %v1539, %v998
    %vm1605 = vcmask 97280
    %v1607 = vsel %vm1605, %v1542, %v1010
    %v1609 = vsel %vm1605, %v1544, %v1012
    %v1611 = vsel %vm1605, %v1546, %v1014
    %v1613 = vsel %vm1605, %v1548, %v1016
    %v1615 = vsel %vm1605, %v1550, %v1018
    %v1617 = vsel %vm1605, %v1552, %v1020
    %v1619 = vsel %vm1605, %v1554, %v1022
    %v1621 = vsel %vm1605, %v1556, %v1024
    %v1623 = vsel %vm1605, %v1558, %v1026
    %v1625 = vsel %vm1605, %v1560, %v1028
    %v1627 = vsel %vm1605, %v1562, %v1030
    %v1629 = vsel %vm1605, %v1564, %v1032
    %v1631 = vsel %vm1605, %v1566, %v1034
    %v1633 = vsel %vm1605, %v1568, %v1036
    %v1635 = vsel %vm1605, %v1570, %v1038
    %v1637 = vsel %vm1605, %v1572, %v1040
    %v1639 = vsel %vm1605, %v1574, %v1042
    %v1641 = vsel %vm1605, %v1576, %v1044
    %v1643 = vsel %vm1605, %v1578, %v1046
    %v1645 = vsel %vm1605, %v1580, %v1048
    %v1647 = vsel %vm1605, %v1582, %v1050
    %v1649 = vsel %vm1605, %v1584, %v1052
    %v1651 = vsel %vm1605, %v1586, %v1054
    %v1653 = vsel %vm1605, %v1588, %v1056
    %v1655 = vsel %vm1605, %v1590, %v1058
    %v1657 = vsel %vm1605, %v1592, %v1060
    %v1659 = vsel %vm1605, %v1594, %v1062
    %v1661 = vsel %vm1605, %v1596, %v1064
    %v1663 = vsel %vm1605, %v1598, %v1066
    %v1665 = vsel %vm1605, %v1600, %v1068
    %v1667 = vsel %vm1605, %v1602, %v1070
    %v1669 = vsel %vm1605, %v1604, %v1072
    %vm1670 = vcmask 130048
    %v1672 = vsel %vm1670, %v1607, %v1104
    %v1674 = vsel %vm1670, %v1609, %v1106
    %v1676 = vsel %vm1670, %v1611, %v1108
    %v1678 = vsel %vm1670, %v1613, %v1110
    %v1680 = vsel %vm1670, %v1615, %v1112
    %v1682 = vsel %vm1670, %v1617, %v1114
    %v1684 = vsel %vm1670, %v1619, %v1116
    %v1686 = vsel %vm1670, %v1621, %v1118
    %v1688 = vsel %vm1670, %v1623, %v1120
    %v1690 = vsel %vm1670, %v1625, %v1122
    %v1692 = vsel %vm1670, %v1627, %v1124
    %v1694 = vsel %vm1670, %v1629, %v1126
    %v1696 = vsel %vm1670, %v1631, %v1128
    %v1698 = vsel %vm1670, %v1633, %v1130
    %v1700 = vsel %vm1670, %v1635, %v1132
    %v1702 = vsel %vm1670, %v1637, %v1134
    %v1704 = vsel %vm1670, %v1639, %v1136
    %v1706 = vsel %vm1670, %v1641, %v1138
    %v1708 = vsel %vm1670, %v1643, %v1140
    %v1710 = vsel %vm1670, %v1645, %v1142
    %v1712 = vsel %vm1670, %v1647, %v1144
    %v1714 = vsel %vm1670, %v1649, %v1146
    %v1716 = vsel %vm1670, %v1651, %v1148
    %v1718 = vsel %vm1670, %v1653, %v1150
    %v1720 = vsel %vm1670, %v1655, %v1152
    %v1722 = vsel %vm1670, %v1657, %v1154
    %v1724 = vsel %vm1670, %v1659, %v1156
    %v1726 = vsel %vm1670, %v1661, %v1158
    %v1728 = vsel %vm1670, %v1663, %v1160
    %v1730 = vsel %vm1670, %v1665, %v1162
    %v1732 = vsel %vm1670, %v1667, %v1164
    %v1734 = vsel %vm1670, %v1669, %v1166
    %vm1735 = vcmask 162816
    %v1737 = vsel %vm1735, %v1672, %v1174
    %v1739 = vsel %vm1735, %v1674, %v1176
    %v1741 = vsel %vm1735, %v1676, %v1178
    %v1743 = vsel %vm1735, %v1678, %v1180
    %v1745 = vsel %vm1735, %v1680, %v1182
    %v1747 = vsel %vm1735, %v1682, %v1184
    %v1749 = vsel %vm1735, %v1684, %v1186
    %v1751 = vsel %vm1735, %v1686, %v1188
    %v1753 = vsel %vm1735, %v1688, %v1190
    %v1755 = vsel %vm1735, %v1690, %v1192
    %v1757 = vsel %vm1735, %v1692, %v1194
    %v1759 = vsel %vm1735, %v1694, %v1196
    %v1761 = vsel %vm1735, %v1696, %v1198
    %v1763 = vsel %vm1735, %v1698, %v1200
    %v1765 = vsel %vm1735, %v1700, %v1202
    %v1767 = vsel %vm1735, %v1702, %v1204
    %v1769 = vsel %vm1735, %v1704, %v1206
    %v1771 = vsel %vm1735, %v1706, %v1208
    %v1773 = vsel %vm1735, %v1708, %v1210
    %v1775 = vsel %vm1735, %v1710, %v1212
    %v1777 = vsel %vm1735, %v1712, %v1214
    %v1779 = vsel %vm1735, %v1714, %v1216
    %v1781 = vsel %vm1735, %v1716, %v1218
    %v1783 = vsel %vm1735, %v1718, %v1220
    %v1785 = vsel %vm1735, %v1720, %v1222
    %v1787 = vsel %vm1735, %v1722, %v1224
    %v1789 = vsel %vm1735, %v1724, %v1226
    %v1791 = vsel %vm1735, %v1726, %v1228
    %v1793 = vsel %vm1735, %v1728, %v1230
    %v1795 = vsel %vm1735, %v1730, %v1232
    %v1797 = vsel %vm1735, %v1732, %v1234
    %v1799 = vsel %vm1735, %v1734, %v1236
    %vm1800 = vcmask 195584
    %v1802 = vsel %vm1800, %v1737, %v1248
    %v1804 = vsel %vm1800, %v1739, %v1250
    %v1806 = vsel %vm1800, %v1741, %v1252
    %v1808 = vsel %vm1800, %v1743, %v1254
    %v1810 = vsel %vm1800, %v1745, %v1256
    %v1812 = vsel %vm1800, %v1747, %v1258
    %v1814 = vsel %vm1800, %v1749, %v1260
    %v1816 = vsel %vm1800, %v1751, %v1262
    %v1818 = vsel %vm1800, %v1753, %v1264
    %v1820 = vsel %vm1800, %v1755, %v1266
    %v1822 = vsel %vm1800, %v1757, %v1268
    %v1824 = vsel %vm1800, %v1759, %v1270
    %v1826 = vsel %vm1800, %v1761, %v1272
    %v1828 = vsel %vm1800, %v1763, %v1274
    %v1830 = vsel %vm1800, %v1765, %v1276
    %v1832 = vsel %vm1800, %v1767, %v1278
    %v1834 = vsel %vm1800, %v1769, %v1280
    %v1836 = vsel %vm1800, %v1771, %v1282
    %v1838 = vsel %vm1800, %v1773, %v1284
    %v1840 = vsel %vm1800, %v1775, %v1286
    %v1842 = vsel %vm1800, %v1777, %v1288
    %v1844 = vsel %vm1800, %v1779, %v1290
    %v1846 = vsel %vm1800, %v1781, %v1292
    %v1848 = vsel %vm1800, %v1783, %v1294
    %v1850 = vsel %vm1800, %v1785, %v1296
    %v1852 = vsel %vm1800, %v1787, %v1298
    %v1854 = vsel %vm1800, %v1789, %v1300
    %v1856 = vsel %vm1800, %v1791, %v1302
    %v1858 = vsel %vm1800, %v1793, %v1304
    %v1860 = vsel %vm1800, %v1795, %v1306
    %v1862 = vsel %vm1800, %v1797, %v1308
    %v1864 = vsel %vm1800, %v1799, %v1310
    %vm1865 = vcmask 228352
    %v1867 = vsel %vm1865, %v1802, %v1342
    %v1869 = vsel %vm1865, %v1804, %v1344
    %v1871 = vsel %vm1865, %v1806, %v1346
    %v1873 = vsel %vm1865, %v1808, %v1348
    %v1875 = vsel %vm1865, %v1810, %v1350
    %v1877 = vsel %vm1865, %v1812, %v1352
    %v1879 = vsel %vm1865, %v1814, %v1354
    %v1881 = vsel %vm1865, %v1816, %v1356
    %v1883 = vsel %vm1865, %v1818, %v1358
    %v1885 = vsel %vm1865, %v1820, %v1360
    %v1887 = vsel %vm1865, %v1822, %v1362
    %v1889 = vsel %vm1865, %v1824, %v1364
    %v1891 = vsel %vm1865, %v1826, %v1366
    %v1893 = vsel %vm1865, %v1828, %v1368
    %v1895 = vsel %vm1865, %v1830, %v1370
    %v1897 = vsel %vm1865, %v1832, %v1372
    %v1899 = vsel %vm1865, %v1834, %v1374
    %v1901 = vsel %vm1865, %v1836, %v1376
    %v1903 = vsel %vm1865, %v1838, %v1378
    %v1905 = vsel %vm1865, %v1840, %v1380
    %v1907 = vsel %vm1865, %v1842, %v1382
    %v1909 = vsel %vm1865, %v1844, %v1384
    %v1911 = vsel %vm1865, %v1846, %v1386
    %v1913 = vsel %vm1865, %v1848, %v1388
    %v1915 = vsel %vm1865, %v1850, %v1390
    %v1917 = vsel %vm1865, %v1852, %v1392
    %v1919 = vsel %vm1865, %v1854, %v1394
    %v1921 = vsel %vm1865, %v1856, %v1396
    %v1923 = vsel %vm1865, %v1858, %v1398
    %v1925 = vsel %vm1865, %v1860, %v1400
    %v1927 = vsel %vm1865, %v1862, %v1402
    %v1929 = vsel %vm1865, %v1864, %v1404
    %vm1930 = vcmask 261120
    %v1932 = vsel %vm1930, %v1867, %v1412
    %v1934 = vsel %vm1930, %v1869, %v1414
    %v1936 = vsel %vm1930, %v1871, %v1416
    %v1938 = vsel %vm1930, %v1873, %v1418
    %v1940 = vsel %vm1930, %v1875, %v1420
    %v1942 = vsel %vm1930, %v1877, %v1422
    %v1944 = vsel %vm1930, %v1879, %v1424
    %v1946 = vsel %vm1930, %v1881, %v1426
    %v1948 = vsel %vm1930, %v1883, %v1428
    %v1950 = vsel %vm1930, %v1885, %v1430
    %v1952 = vsel %vm1930, %v1887, %v1432
    %v1954 = vsel %vm1930, %v1889, %v1434
    %v1956 = vsel %vm1930, %v1891, %v1436
    %v1958 = vsel %vm1930, %v1893, %v1438
    %v1960 = vsel %vm1930, %v1895, %v1440
    %v1962 = vsel %vm1930, %v1897, %v1442
    %v1964 = vsel %vm1930, %v1899, %v1444
    %v1966 = vsel %vm1930, %v1901, %v1446
    %v1968 = vsel %vm1930, %v1903, %v1448
    %v1970 = vsel %vm1930, %v1905, %v1450
    %v1972 = vsel %vm1930, %v1907, %v1452
    %v1974 = vsel %vm1930, %v1909, %v1454
    %v1976 = vsel %vm1930, %v1911, %v1456
    %v1978 = vsel %vm1930, %v1913, %v1458
    %v1980 = vsel %vm1930, %v1915, %v1460
    %v1982 = vsel %vm1930, %v1917, %v1462
    %v1984 = vsel %vm1930, %v1919, %v1464
    %v1986 = vsel %vm1930, %v1921, %v1466
    %v1988 = vsel %vm1930, %v1923, %v1468
    %v1990 = vsel %vm1930, %v1925, %v1470
    %v1992 = vsel %vm1930, %v1927, %v1472
    %v1994 = vsel %vm1930, %v1929, %v1474
    %v1995 = vld [vmem:[%s1] sm:$0xf]
    %v1996 = vld [vmem:[%s1 + $0x4] sm:$0xf]
    %v1997 = vld [vmem:[%s1 + $0x8] sm:$0xf]
    %v1998 = vld [vmem:[%s1 + $0xc] sm:$0xf]
    %v1999 = vld [vmem:[%s1 + $0x10] sm:$0x3]
    %v2000 = vld [vmem:[%s2] sm:$0x1]
    %v2002 = vlaneseq
    %v2003 = vshrl.u32 %v2002, 7
    %v2004 = vsub.s32 0, %v2003
    %v2005 = vrot.slane %v2000, %v2004
    %v2012 = vunpack.c.l.b16 %v1995
    %v2013 = vunpack.c.l.b16 %v1996
    %v2014 = vunpack.c.l.b16 %v1997
    %v2015 = vunpack.c.l.b16 %v1998
    %v2016 = vunpack.c.l.b16 %v1999
    %v2017 = vpack.c.b16 %v2013, %v2012
    %v2018 = vpack.c.b16 %v2015, %v2014
    %v2019 = vpack.c.b16 %v2016, %v2016
    %vm2022 = vcmask 293888
    %v2023 = vsel %vm2022, %v1932, 0
    %v2025 = vsel %vm2022, %v1934, 0
    %v2027 = vsel %vm2022, %v1936, 0
    %v2029 = vsel %vm2022, %v1938, 0
    %v2031 = vsel %vm2022, %v1940, 0
    %v2033 = vsel %vm2022, %v1942, 0
    %v2035 = vsel %vm2022, %v1944, 0
    %v2037 = vsel %vm2022, %v1946, 0
    %v2039 = vsel %vm2022, %v1948, 0
    %v2041 = vsel %vm2022, %v1950, 0
    %v2043 = vsel %vm2022, %v1952, 0
    %v2045 = vsel %vm2022, %v1954, 0
    %v2047 = vsel %vm2022, %v1956, 0
    %v2049 = vsel %vm2022, %v1958, 0
    %v2051 = vsel %vm2022, %v1960, 0
    %v2053 = vsel %vm2022, %v1962, 0
    %v2055 = vsel %vm2022, %v1964, 0
    %v2057 = vsel %vm2022, %v1966, 0
    %v2059 = vsel %vm2022, %v1968, 0
    %v2061 = vsel %vm2022, %v1970, 0
    %v2063 = vsel %vm2022, %v1972, 0
    %v2065 = vsel %vm2022, %v1974, 0
    %v2067 = vsel %vm2022, %v1976, 0
    %v2069 = vsel %vm2022, %v1978, 0
    %v2071 = vsel %vm2022, %v1980, 0
    %v2073 = vsel %vm2022, %v1982, 0
    %v2075 = vsel %vm2022, %v1984, 0
    %v2077 = vsel %vm2022, %v1986, 0
    %v2079 = vsel %vm2022, %v1988, 0
    %v2081 = vsel %vm2022, %v1990, 0
    %v2083 = vsel %vm2022, %v1992, 0
    %v2085 = vsel %vm2022, %v1994, 0
    %vm2087 = vcmask 1041408
    %v2089 = vsel %vm2087, %v2019, 0
    %2091 = vmatprep.subr.bf16.mxu0 0
    %2092 = vmatpush1.bf16.msra.mxu0 %v2017
    %2093 = vmatprep.subr.bf16.mxu0 0
    %2094 = vmatpush1.bf16.msra.mxu0 %v2018
    %2095 = vmatprep.subr.bf16.mxu0 0
    %2096 = vmatpush1.bf16.msra.mxu0 %v2089
    %2097 = vmatprep.subr.bf16.mxu0 0
    %2098 = vmatpush1.bf16.msra.mxu0 0
    %2099 = vmatprep.subr.bf16.mxu0 0
    %2100 = vmatpush1.bf16.msra.mxu0 0
    %2101 = vmatprep.subr.bf16.mxu0 0
    %2102 = vmatpush1.bf16.msra.mxu0 0
    %2103 = vmatprep.subr.bf16.mxu0 0
    %2104 = vmatpush1.bf16.msra.mxu0 0
    %2105 = vmatprep.subr.bf16.mxu0 0
    %2106 = vmatpush1.bf16.msra.mxu0 0
    %2107 = vmatprep.subr.bf16.mxu0 0
    %2108 = vmatpush1.bf16.msra.mxu0 0
    %2109 = vmatprep.subr.bf16.mxu0 0
    %2110 = vmatpush1.bf16.msra.mxu0 0
    %2111 = vmatprep.subr.bf16.mxu0 0
    %2112 = vmatpush1.bf16.msra.mxu0 0
    %2113 = vmatprep.subr.bf16.mxu0 0
    %2114 = vmatpush1.bf16.msra.mxu0 0
    %2115 = vmatprep.subr.bf16.mxu0 0
    %2116 = vmatpush1.bf16.msra.mxu0 0
    %2117 = vmatprep.subr.bf16.mxu0 0
    %2118 = vmatpush1.bf16.msra.mxu0 0
    %2119 = vmatprep.subr.bf16.mxu0 0
    %2120 = vmatpush1.bf16.msra.mxu0 0
    %2121 = vmatprep.subr.bf16.mxu0 0
    %2122 = vmatpush1.bf16.msra.mxu0 0
    %2123 = vmatprep.mubr.bf16.mxu0 0
    %2124 = vmatmul.mubr.bf16.gmra.mrb[0].mxu0 %v2023
    %v2125 = vpop.f32.mrb[0].mxu0
    %v2126 = vadd.f32 %v2005, %v2125
    %v2127 = vpop.f32.mrb[0].mxu0
    %v2128 = vpop.f32.mrb[0].mxu0
    %v2129 = vadd.f32 %v2005, %v2128
    %v2130 = vpop.f32.mrb[0].mxu0
    %2131 = vmatprep.mubr.bf16.mxu0 0
    %2132 = vmatmul.mubr.bf16.gmra.mrb[0].mxu0 %v2025
    %v2133 = vpop.f32.mrb[0].mxu0
    %v2134 = vadd.f32 %v2005, %v2133
    %v2135 = vpop.f32.mrb[0].mxu0
    %v2136 = vpop.f32.mrb[0].mxu0
    %v2137 = vadd.f32 %v2005, %v2136
    %v2138 = vpop.f32.mrb[0].mxu0
    %2139 = vmatprep.mubr.bf16.mxu0 0
    %2140 = vmatmul.mubr.bf16.gmra.mrb[0].mxu0 %v2027
    %v2141 = vpop.f32.mrb[0].mxu0
    %v2142 = vadd.f32 %v2005, %v2141
    %v2143 = vpop.f32.mrb[0].mxu0
    %v2144 = vpop.f32.mrb[0].mxu0
    %v2145 = vadd.f32 %v2005, %v2144
    %v2146 = vpop.f32.mrb[0].mxu0
    %2147 = vmatprep.mubr.bf16.mxu0 0
    %2148 = vmatmul.mubr.bf16.gmra.mrb[0].mxu0 %v2029
    %v2149 = vpop.f32.mrb[0].mxu0
    %v2150 = vadd.f32 %v2005, %v2149
    %v2151 = vpop.f32.mrb[0].mxu0
    %v2152 = vpop.f32.mrb[0].mxu0
    %v2153 = vadd.f32 %v2005, %v2152
    %v2154 = vpop.f32.mrb[0].mxu0
    %2155 = vmatprep.mubr.bf16.mxu0 0
    %2156 = vmatmul.mubr.bf16.gmra.mrb[0].mxu0 %v2031
    %v2157 = vpop.f32.mrb[0].mxu0
    %v2158 = vadd.f32 %v2005, %v2157
    %v2159 = vpop.f32.mrb[0].mxu0
    %v2160 = vpop.f32.mrb[0].mxu0
    %v2161 = vadd.f32 %v2005, %v2160
    %v2162 = vpop.f32.mrb[0].mxu0
    %2163 = vmatprep.mubr.bf16.mxu0 0
    %2164 = vmatmul.mubr.bf16.gmra.mrb[0].mxu0 %v2033
    %v2165 = vpop.f32.mrb[0].mxu0
    %v2166 = vadd.f32 %v2005, %v2165
    %v2167 = vpop.f32.mrb[0].mxu0
    %v2168 = vpop.f32.mrb[0].mxu0
    %v2169 = vadd.f32 %v2005, %v2168
    %v2170 = vpop.f32.mrb[0].mxu0
    %2171 = vmatprep.mubr.bf16.mxu0 0
    %2172 = vmatmul.mubr.bf16.gmra.mrb[0].mxu0 %v2035
    %v2173 = vpop.f32.mrb[0].mxu0
    %v2174 = vadd.f32 %v2005, %v2173
    %v2175 = vpop.f32.mrb[0].mxu0
    %v2176 = vpop.f32.mrb[0].mxu0
    %v2177 = vadd.f32 %v2005, %v2176
    %v2178 = vpop.f32.mrb[0].mxu0
    %2179 = vmatprep.mubr.bf16.mxu0 0
    %2180 = vmatmul.mubr.bf16.gmra.mrb[0].mxu0 %v2037
    %v2181 = vpop.f32.mrb[0].mxu0
    %v2182 = vadd.f32 %v2005, %v2181
    %v2183 = vpop.f32.mrb[0].mxu0
    %v2184 = vpop.f32.mrb[0].mxu0
    %v2185 = vadd.f32 %v2005, %v2184
    %v2186 = vpop.f32.mrb[0].mxu0
    %2187 = vmatprep.mubr.bf16.mxu0 0
    %2188 = vmatmul.mubr.bf16.gmra.mrb[0].mxu0 %v2039
    %v2189 = vpop.f32.mrb[0].mxu0
    %v2190 = vadd.f32 %v2005, %v2189
    %v2191 = vpop.f32.mrb[0].mxu0
    %v2192 = vpop.f32.mrb[0].mxu0
    %v2193 = vadd.f32 %v2005, %v2192
    %v2194 = vpop.f32.mrb[0].mxu0
    %2195 = vmatprep.mubr.bf16.mxu0 0
    %2196 = vmatmul.mubr.bf16.gmra.mrb[0].mxu0 %v2041
    %v2197 = vpop.f32.mrb[0].mxu0
    %v2198 = vadd.f32 %v2005, %v2197
    %v2199 = vpop.f32.mrb[0].mxu0
    %v2200 = vpop.f32.mrb[0].mxu0
    %v2201 = vadd.f32 %v2005, %v2200
    %v2202 = vpop.f32.mrb[0].mxu0
    %2203 = vmatprep.mubr.bf16.mxu0 0
    %2204 = vmatmul.mubr.bf16.gmra.mrb[0].mxu0 %v2043
    %v2205 = vpop.f32.mrb[0].mxu0
    %v2206 = vadd.f32 %v2005, %v2205
    %v2207 = vpop.f32.mrb[0].mxu0
    %v2208 = vpop.f32.mrb[0].mxu0
    %v2209 = vadd.f32 %v2005, %v2208
    %v2210 = vpop.f32.mrb[0].mxu0
    %2211 = vmatprep.mubr.bf16.mxu0 0
    %2212 = vmatmul.mubr.bf16.gmra.mrb[0].mxu0 %v2045
    %v2213 = vpop.f32.mrb[0].mxu0
    %v2214 = vadd.f32 %v2005, %v2213
    %v2215 = vpop.f32.mrb[0].mxu0
    %v2216 = vpop.f32.mrb[0].mxu0
    %v2217 = vadd.f32 %v2005, %v2216
    %v2218 = vpop.f32.mrb[0].mxu0
    %2219 = vmatprep.mubr.bf16.mxu0 0
    %2220 = vmatmul.mubr.bf16.gmra.mrb[0].mxu0 %v2047
    %v2221 = vpop.f32.mrb[0].mxu0
    %v2222 = vadd.f32 %v2005, %v2221
    %v2223 = vpop.f32.mrb[0].mxu0
    %v2224 = vpop.f32.mrb[0].mxu0
    %v2225 = vadd.f32 %v2005, %v2224
    %v2226 = vpop.f32.mrb[0].mxu0
    %2227 = vmatprep.mubr.bf16.mxu0 0
    %2228 = vmatmul.mubr.bf16.gmra.mrb[0].mxu0 %v2049
    %v2229 = vpop.f32.mrb[0].mxu0
    %v2230 = vadd.f32 %v2005, %v2229
    %v2231 = vpop.f32.mrb[0].mxu0
    %v2232 = vpop.f32.mrb[0].mxu0
    %v2233 = vadd.f32 %v2005, %v2232
    %v2234 = vpop.f32.mrb[0].mxu0
    %2235 = vmatprep.mubr.bf16.mxu0 0
    %2236 = vmatmul.mubr.bf16.gmra.mrb[0].mxu0 %v2051
    %v2237 = vpop.f32.mrb[0].mxu0
    %v2238 = vadd.f32 %v2005, %v2237
    %v2239 = vpop.f32.mrb[0].mxu0
    %v2240 = vpop.f32.mrb[0].mxu0
    %v2241 = vadd.f32 %v2005, %v2240
    %v2242 = vpop.f32.mrb[0].mxu0
    %2243 = vmatprep.mubr.bf16.mxu0 0
    %2244 = vmatmul.mubr.bf16.gmra.mrb[0].mxu0 %v2053
    %v2245 = vpop.f32.mrb[0].mxu0
    %v2246 = vadd.f32 %v2005, %v2245
    %v2247 = vpop.f32.mrb[0].mxu0
    %v2248 = vpop.f32.mrb[0].mxu0
    %v2249 = vadd.f32 %v2005, %v2248
    %v2250 = vpop.f32.mrb[0].mxu0
    %2251 = vmatprep.mubr.bf16.mxu0 0
    %2252 = vmatmul.mubr.bf16.gmra.mrb[0].mxu0 %v2055
    %v2253 = vpop.f32.mrb[0].mxu0
    %v2254 = vadd.f32 %v2005, %v2253
    %v2255 = vpop.f32.mrb[0].mxu0
    %v2256 = vpop.f32.mrb[0].mxu0
    %v2257 = vadd.f32 %v2005, %v2256
    %v2258 = vpop.f32.mrb[0].mxu0
    %2259 = vmatprep.mubr.bf16.mxu0 0
    %2260 = vmatmul.mubr.bf16.gmra.mrb[0].mxu0 %v2057
    %v2261 = vpop.f32.mrb[0].mxu0
    %v2262 = vadd.f32 %v2005, %v2261
    %v2263 = vpop.f32.mrb[0].mxu0
    %v2264 = vpop.f32.mrb[0].mxu0
    %v2265 = vadd.f32 %v2005, %v2264
    %v2266 = vpop.f32.mrb[0].mxu0
    %2267 = vmatprep.mubr.bf16.mxu0 0
    %2268 = vmatmul.mubr.bf16.gmra.mrb[0].mxu0 %v2059
    %v2269 = vpop.f32.mrb[0].mxu0
    %v2270 = vadd.f32 %v2005, %v2269
    %v2271 = vpop.f32.mrb[0].mxu0
    %v2272 = vpop.f32.mrb[0].mxu0
    %v2273 = vadd.f32 %v2005, %v2272
    %v2274 = vpop.f32.mrb[0].mxu0
    %2275 = vmatprep.mubr.bf16.mxu0 0
    %2276 = vmatmul.mubr.bf16.gmra.mrb[0].mxu0 %v2061
    %v2277 = vpop.f32.mrb[0].mxu0
    %v2278 = vadd.f32 %v2005, %v2277
    %v2279 = vpop.f32.mrb[0].mxu0
    %v2280 = vpop.f32.mrb[0].mxu0
    %v2281 = vadd.f32 %v2005, %v2280
    %v2282 = vpop.f32.mrb[0].mxu0
    %2283 = vmatprep.mubr.bf16.mxu0 0
    %2284 = vmatmul.mubr.bf16.gmra.mrb[0].mxu0 %v2063
    %v2285 = vpop.f32.mrb[0].mxu0
    %v2286 = vadd.f32 %v2005, %v2285
    %v2287 = vpop.f32.mrb[0].mxu0
    %v2288 = vpop.f32.mrb[0].mxu0
    %v2289 = vadd.f32 %v2005, %v2288
    %v2290 = vpop.f32.mrb[0].mxu0
    %2291 = vmatprep.mubr.bf16.mxu0 0
    %2292 = vmatmul.mubr.bf16.gmra.mrb[0].mxu0 %v2065
    %v2293 = vpop.f32.mrb[0].mxu0
    %v2294 = vadd.f32 %v2005, %v2293
    %v2295 = vpop.f32.mrb[0].mxu0
    %v2296 = vpop.f32.mrb[0].mxu0
    %v2297 = vadd.f32 %v2005, %v2296
    %v2298 = vpop.f32.mrb[0].mxu0
    %2299 = vmatprep.mubr.bf16.mxu0 0
    %2300 = vmatmul.mubr.bf16.gmra.mrb[0].mxu0 %v2067
    %v2301 = vpop.f32.mrb[0].mxu0
    %v2302 = vadd.f32 %v2005, %v2301
    %v2303 = vpop.f32.mrb[0].mxu0
    %v2304 = vpop.f32.mrb[0].mxu0
    %v2305 = vadd.f32 %v2005, %v2304
    %v2306 = vpop.f32.mrb[0].mxu0
    %2307 = vmatprep.mubr.bf16.mxu0 0
    %2308 = vmatmul.mubr.bf16.gmra.mrb[0].mxu0 %v2069
    %v2309 = vpop.f32.mrb[0].mxu0
    %v2310 = vadd.f32 %v2005, %v2309
    %v2311 = vpop.f32.mrb[0].mxu0
    %v2312 = vpop.f32.mrb[0].mxu0
    %v2313 = vadd.f32 %v2005, %v2312
    %v2314 = vpop.f32.mrb[0].mxu0
    %2315 = vmatprep.mubr.bf16.mxu0 0
    %2316 = vmatmul.mubr.bf16.gmra.mrb[0].mxu0 %v2071
    %v2317 = vpop.f32.mrb[0].mxu0
    %v2318 = vadd.f32 %v2005, %v2317
    %v2319 = vpop.f32.mrb[0].mxu0
    %v2320 = vpop.f32.mrb[0].mxu0
    %v2321 = vadd.f32 %v2005, %v2320
    %v2322 = vpop.f32.mrb[0].mxu0
    %2323 = vmatprep.mubr.bf16.mxu0 0
    %2324 = vmatmul.mubr.bf16.gmra.mrb[0].mxu0 %v2073
    %v2325 = vpop.f32.mrb[0].mxu0
    %v2326 = vadd.f32 %v2005, %v2325
    %v2327 = vpop.f32.mrb[0].mxu0
    %v2328 = vpop.f32.mrb[0].mxu0
    %v2329 = vadd.f32 %v2005, %v2328
    %v2330 = vpop.f32.mrb[0].mxu0
    %2331 = vmatprep.mubr.bf16.mxu0 0
    %2332 = vmatmul.mubr.bf16.gmra.mrb[0].mxu0 %v2075
    %v2333 = vpop.f32.mrb[0].mxu0
    %v2334 = vadd.f32 %v2005, %v2333
    %v2335 = vpop.f32.mrb[0].mxu0
    %v2336 = vpop.f32.mrb[0].mxu0
    %v2337 = vadd.f32 %v2005, %v2336
    %v2338 = vpop.f32.mrb[0].mxu0
    %2339 = vmatprep.mubr.bf16.mxu0 0
    %2340 = vmatmul.mubr.bf16.gmra.mrb[0].mxu0 %v2077
    %v2341 = vpop.f32.mrb[0].mxu0
    %v2342 = vadd.f32 %v2005, %v2341
    %v2343 = vpop.f32.mrb[0].mxu0
    %v2344 = vpop.f32.mrb[0].mxu0
    %v2345 = vadd.f32 %v2005, %v2344
    %v2346 = vpop.f32.mrb[0].mxu0
    %2347 = vmatprep.mubr.bf16.mxu0 0
    %2348 = vmatmul.mubr.bf16.gmra.mrb[0].mxu0 %v2079
    %v2349 = vpop.f32.mrb[0].mxu0
    %v2350 = vadd.f32 %v2005, %v2349
    %v2351 = vpop.f32.mrb[0].mxu0
    %v2352 = vpop.f32.mrb[0].mxu0
    %v2353 = vadd.f32 %v2005, %v2352
    %v2354 = vpop.f32.mrb[0].mxu0
    %2355 = vmatprep.mubr.bf16.mxu0 0
    %2356 = vmatmul.mubr.bf16.gmra.mrb[0].mxu0 %v2081
    %v2357 = vpop.f32.mrb[0].mxu0
    %v2358 = vadd.f32 %v2005, %v2357
    %v2359 = vpop.f32.mrb[0].mxu0
    %v2360 = vpop.f32.mrb[0].mxu0
    %v2361 = vadd.f32 %v2005, %v2360
    %v2362 = vpop.f32.mrb[0].mxu0
    %2363 = vmatprep.mubr.bf16.mxu0 0
    %2364 = vmatmul.mubr.bf16.gmra.mrb[0].mxu0 %v2083
    %v2365 = vpop.f32.mrb[0].mxu0
    %v2366 = vadd.f32 %v2005, %v2365
    %v2367 = vpop.f32.mrb[0].mxu0
    %v2368 = vpop.f32.mrb[0].mxu0
    %v2369 = vadd.f32 %v2005, %v2368
    %v2370 = vpop.f32.mrb[0].mxu0
    %2371 = vmatprep.mubr.bf16.mxu0 0
    %2372 = vmatmul.mubr.bf16.gmra.mrb[0].mxu0 %v2085
    %v2373 = vpop.f32.mrb[0].mxu0
    %v2374 = vadd.f32 %v2005, %v2373
    %v2375 = vpop.f32.mrb[0].mxu0
    %v2376 = vpop.f32.mrb[0].mxu0
    %v2377 = vadd.f32 %v2005, %v2376
    %v2378 = vpop.f32.mrb[0].mxu0
    %2379 = vdwg.mxu0
    %v2380 = vmax.f32 %v2126, 0.0
    %v2381 = vmax.f32 %v2129, 0.0
    %v2382 = vmax.f32 %v2134, 0.0
    %v2383 = vmax.f32 %v2137, 0.0
    %v2384 = vmax.f32 %v2142, 0.0
    %v2385 = vmax.f32 %v2145, 0.0
    %v2386 = vmax.f32 %v2150, 0.0
    %v2387 = vmax.f32 %v2153, 0.0
    %v2388 = vmax.f32 %v2158, 0.0
    %v2389 = vmax.f32 %v2161, 0.0
    %v2390 = vmax.f32 %v2166, 0.0
    %v2391 = vmax.f32 %v2169, 0.0
    %v2392 = vmax.f32 %v2174, 0.0
    %v2393 = vmax.f32 %v2177, 0.0
    %v2394 = vmax.f32 %v2182, 0.0
    %v2395 = vmax.f32 %v2185, 0.0
    %v2396 = vmax.f32 %v2190, 0.0
    %v2397 = vmax.f32 %v2193, 0.0
    %v2398 = vmax.f32 %v2198, 0.0
    %v2399 = vmax.f32 %v2201, 0.0
    %v2400 = vmax.f32 %v2206, 0.0
    %v2401 = vmax.f32 %v2209, 0.0
    %v2402 = vmax.f32 %v2214, 0.0
    %v2403 = vmax.f32 %v2217, 0.0
    %v2404 = vmax.f32 %v2222, 0.0
    %v2405 = vmax.f32 %v2225, 0.0
    %v2406 = vmax.f32 %v2230, 0.0
    %v2407 = vmax.f32 %v2233, 0.0
    %v2408 = vmax.f32 %v2238, 0.0
    %v2409 = vmax.f32 %v2241, 0.0
    %v2410 = vmax.f32 %v2246, 0.0
    %v2411 = vmax.f32 %v2249, 0.0
    %v2412 = vmax.f32 %v2254, 0.0
    %v2413 = vmax.f32 %v2257, 0.0
    %v2414 = vmax.f32 %v2262, 0.0
    %v2415 = vmax.f32 %v2265, 0.0
    %v2416 = vmax.f32 %v2270, 0.0
    %v2417 = vmax.f32 %v2273, 0.0
    %v2418 = vmax.f32 %v2278, 0.0
    %v2419 = vmax.f32 %v2281, 0.0
    %v2420 = vmax.f32 %v2286, 0.0
    %v2421 = vmax.f32 %v2289, 0.0
    %v2422 = vmax.f32 %v2294, 0.0
    %v2423 = vmax.f32 %v2297, 0.0
    %v2424 = vmax.f32 %v2302, 0.0
    %v2425 = vmax.f32 %v2305, 0.0
    %v2426 = vmax.f32 %v2310, 0.0
    %v2427 = vmax.f32 %v2313, 0.0
    %v2428 = vmax.f32 %v2318, 0.0
    %v2429 = vmax.f32 %v2321, 0.0
    %v2430 = vmax.f32 %v2326, 0.0
    %v2431 = vmax.f32 %v2329, 0.0
    %v2432 = vmax.f32 %v2334, 0.0
    %v2433 = vmax.f32 %v2337, 0.0
    %v2434 = vmax.f32 %v2342, 0.0
    %v2435 = vmax.f32 %v2345, 0.0
    %v2436 = vmax.f32 %v2350, 0.0
    %v2437 = vmax.f32 %v2353, 0.0
    %v2438 = vmax.f32 %v2358, 0.0
    %v2439 = vmax.f32 %v2361, 0.0
    %v2440 = vmax.f32 %v2366, 0.0
    %v2441 = vmax.f32 %v2369, 0.0
    %v2442 = vmax.f32 %v2374, 0.0
    %v2443 = vmax.f32 %v2377, 0.0
    %v2444 = vadd.f32 %v2380, %v2381
    %v2445 = vadd.f32 %v2444, %v2382
    %v2446 = vadd.f32 %v2445, %v2383
    %v2447 = vadd.f32 %v2446, %v2384
    %v2448 = vadd.f32 %v2447, %v2385
    %v2449 = vadd.f32 %v2448, %v2386
    %v2450 = vadd.f32 %v2449, %v2387
    %v2451 = vadd.f32 %v2450, %v2388
    %v2452 = vadd.f32 %v2451, %v2389
    %v2453 = vadd.f32 %v2452, %v2390
    %v2454 = vadd.f32 %v2453, %v2391
    %v2455 = vadd.f32 %v2454, %v2392
    %v2456 = vadd.f32 %v2455, %v2393
    %v2457 = vadd.f32 %v2456, %v2394
    %v2458 = vadd.f32 %v2457, %v2395
    %v2459 = vadd.f32 %v2458, %v2396
    %v2460 = vadd.f32 %v2459, %v2397
    %v2461 = vadd.f32 %v2460, %v2398
    %v2462 = vadd.f32 %v2461, %v2399
    %v2463 = vadd.f32 %v2462, %v2400
    %v2464 = vadd.f32 %v2463, %v2401
    %v2465 = vadd.f32 %v2464, %v2402
    %v2466 = vadd.f32 %v2465, %v2403
    %v2467 = vadd.f32 %v2466, %v2404
    %v2468 = vadd.f32 %v2467, %v2405
    %v2469 = vadd.f32 %v2468, %v2406
    %v2470 = vadd.f32 %v2469, %v2407
    %v2471 = vadd.f32 %v2470, %v2408
    %v2472 = vadd.f32 %v2471, %v2409
    %v2473 = vadd.f32 %v2472, %v2410
    %v2474 = vadd.f32 %v2473, %v2411
    %v2475 = vrot.slane %v2474, 4
    %v2476 = vadd.f32 %v2474, %v2475
    %v2477 = vrot.slane %v2476, 2
    %v2478 = vadd.f32 %v2476, %v2477
    %v2479 = vrot.slane %v2478, 1
    %v2480 = vadd.f32 %v2478, %v2479
    %v2481 = vadd.f32 %v2412, %v2413
    %v2482 = vadd.f32 %v2481, %v2414
    %v2483 = vadd.f32 %v2482, %v2415
    %v2484 = vadd.f32 %v2483, %v2416
    %v2485 = vadd.f32 %v2484, %v2417
    %v2486 = vadd.f32 %v2485, %v2418
    %v2487 = vadd.f32 %v2486, %v2419
    %v2488 = vadd.f32 %v2487, %v2420
    %v2489 = vadd.f32 %v2488, %v2421
    %v2490 = vadd.f32 %v2489, %v2422
    %v2491 = vadd.f32 %v2490, %v2423
    %v2492 = vadd.f32 %v2491, %v2424
    %v2493 = vadd.f32 %v2492, %v2425
    %v2494 = vadd.f32 %v2493, %v2426
    %v2495 = vadd.f32 %v2494, %v2427
    %v2496 = vadd.f32 %v2495, %v2428
    %v2497 = vadd.f32 %v2496, %v2429
    %v2498 = vadd.f32 %v2497, %v2430
    %v2499 = vadd.f32 %v2498, %v2431
    %v2500 = vadd.f32 %v2499, %v2432
    %v2501 = vadd.f32 %v2500, %v2433
    %v2502 = vadd.f32 %v2501, %v2434
    %v2503 = vadd.f32 %v2502, %v2435
    %v2504 = vadd.f32 %v2503, %v2436
    %v2505 = vadd.f32 %v2504, %v2437
    %v2506 = vadd.f32 %v2505, %v2438
    %v2507 = vadd.f32 %v2506, %v2439
    %v2508 = vadd.f32 %v2507, %v2440
    %v2509 = vadd.f32 %v2508, %v2441
    %v2510 = vadd.f32 %v2509, %v2442
    %v2511 = vadd.f32 %v2510, %v2443
    %v2512 = vrot.slane %v2511, 4
    %v2513 = vadd.f32 %v2511, %v2512
    %v2514 = vrot.slane %v2513, 2
    %v2515 = vadd.f32 %v2513, %v2514
    %v2516 = vrot.slane %v2515, 1
    %v2517 = vadd.f32 %v2515, %v2516
    %v2518 = vmul.f32 %v2480, 0.00390625
    %v2519 = vmul.f32 %v2517, 0.00390625
    %vm2522 = vcmask 1041409
    %v2523 = vsel %vm2522, %v2519, %v2518
    %2525 = vst [vmem:[#allocation2] sm:$0x3] %v2523
    %v2526 = vpack.c.bf16 %v2518, %v2518
    %v2527 = vpack.c.bf16 %v2519, %v2519
    %v2528 = vld [vmem:[%s3] sm:$0xf]
    %v2529 = vld [vmem:[%s3 + $0x4] sm:$0xf]
    %v2530 = vld [vmem:[%s3 + $0x8] sm:$0xf]
    %v2531 = vld [vmem:[%s3 + $0xc] sm:$0xf]
    %v2532 = vld [vmem:[%s3 + $0x10] sm:$0xf]
    %v2533 = vld [vmem:[%s3 + $0x14] sm:$0xf]
    %v2534 = vld [vmem:[%s3 + $0x18] sm:$0xf]
    %v2535 = vld [vmem:[%s3 + $0x1c] sm:$0xf]
    %v2536 = vld [vmem:[%s3 + $0x20] sm:$0xf]
    %v2537 = vld [vmem:[%s3 + $0x24] sm:$0xf]
    %v2538 = vld [vmem:[%s3 + $0x28] sm:$0xf]
    %v2539 = vld [vmem:[%s3 + $0x2c] sm:$0xf]
    %v2540 = vld [vmem:[%s3 + $0x30] sm:$0xf]
    %v2541 = vld [vmem:[%s3 + $0x34] sm:$0xf]
    %v2542 = vld [vmem:[%s3 + $0x38] sm:$0xf]
    %v2543 = vld [vmem:[%s3 + $0x3c] sm:$0xf]
    %v2544 = vld [vmem:[%s4] sm:$0x1]
    %v2546 = vlaneseq
    %v2547 = vshrl.u32 %v2546, 7
    %v2548 = vsub.s32 0, %v2547
    %v2549 = vrot.slane %v2544, %v2548
    %v2553 = vunpack.c.l.b16 %v2526
    %v2554 = vunpack.c.l.b16 %v2527
    %v2555 = vsel %vm2522, %v2554, %v2553
    %v2556 = vpack.c.b16 %v2555, %v2555
    %v2574 = vunpack.c.l.b16 %v2528
    %v2575 = vunpack.c.l.b16 %v2529
    %v2576 = vunpack.c.l.b16 %v2530
    %v2577 = vunpack.c.l.b16 %v2531
    %v2578 = vunpack.c.l.b16 %v2532
    %v2579 = vunpack.c.l.b16 %v2533
    %v2580 = vunpack.c.l.b16 %v2534
    %v2581 = vunpack.c.l.b16 %v2535
    %v2582 = vunpack.c.l.b16 %v2536
    %v2583 = vunpack.c.l.b16 %v2537
    %v2584 = vunpack.c.l.b16 %v2538
    %v2585 = vunpack.c.l.b16 %v2539
    %v2586 = vunpack.c.l.b16 %v2540
    %v2587 = vunpack.c.l.b16 %v2541
    %v2588 = vunpack.c.l.b16 %v2542
    %v2589 = vunpack.c.l.b16 %v2543
    %v2590 = vpack.c.b16 %v2575, %v2574
    %v2591 = vpack.c.b16 %v2577, %v2576
    %v2592 = vpack.c.b16 %v2579, %v2578
    %v2593 = vpack.c.b16 %v2581, %v2580
    %v2594 = vpack.c.b16 %v2583, %v2582
    %v2595 = vpack.c.b16 %v2585, %v2584
    %v2596 = vpack.c.b16 %v2587, %v2586
    %v2597 = vpack.c.b16 %v2589, %v2588
    %2606 = vmatprep.subr.bf16.mxu0 0
    %2607 = vmatpush1.bf16.msra.mxu0 %v2590
    %2608 = vmatprep.subr.bf16.mxu0 0
    %2609 = vmatpush1.bf16.msra.mxu0 %v2591
    %2610 = vmatprep.subr.bf16.mxu0 0
    %2611 = vmatpush1.bf16.msra.mxu0 %v2592
    %2612 = vmatprep.subr.bf16.mxu0 0
    %2613 = vmatpush1.bf16.msra.mxu0 %v2593
    %2614 = vmatprep.subr.bf16.mxu0 0
    %2615 = vmatpush1.bf16.msra.mxu0 %v2594
    %2616 = vmatprep.subr.bf16.mxu0 0
    %2617 = vmatpush1.bf16.msra.mxu0 %v2595
    %2618 = vmatprep.subr.bf16.mxu0 0
    %2619 = vmatpush1.bf16.msra.mxu0 %v2596
    %2620 = vmatprep.subr.bf16.mxu0 0
    %2621 = vmatpush1.bf16.msra.mxu0 %v2597
    %2622 = vmatprep.subr.bf16.mxu0 0
    %2623 = vmatpush1.bf16.msra.mxu0 0
    %2624 = vmatprep.subr.bf16.mxu0 0
    %2625 = vmatpush1.bf16.msra.mxu0 0
    %2626 = vmatprep.subr.bf16.mxu0 0
    %2627 = vmatpush1.bf16.msra.mxu0 0
    %2628 = vmatprep.subr.bf16.mxu0 0
    %2629 = vmatpush1.bf16.msra.mxu0 0
    %2630 = vmatprep.subr.bf16.mxu0 0
    %2631 = vmatpush1.bf16.msra.mxu0 0
    %2632 = vmatprep.subr.bf16.mxu0 0
    %2633 = vmatpush1.bf16.msra.mxu0 0
    %2634 = vmatprep.subr.bf16.mxu0 0
    %2635 = vmatpush1.bf16.msra.mxu0 0
    %2636 = vmatprep.subr.bf16.mxu0 0
    %2637 = vmatpush1.bf16.msra.mxu0 0
    %2638 = vmatprep.mubr.bf16.mxu0 0
    %2639 = vmatmul.mubr.bf16.gmra.mrb[0].mxu0 %v2556
    %v2640 = vpop.f32.mrb[0].mxu0
    %v2641 = vadd.f32 %v2549, %v2640
    %v2642 = vpop.f32.mrb[0].mxu0
    %v2643 = vpop.f32.mrb[0].mxu0
    %v2644 = vpop.f32.mrb[0].mxu0
    %2645 = vdwg.mxu0
    %2646 = vst [vmem:[#allocation4] sm:$0x3] %v2641
    // Predicated region
    $region22: #{_fused_forward.1} parent=1 // pred_check
      _
    $region23: #{_fused_forward.1} parent=1 // pred_check_branch
      %2648 = sbr.rel (0) target = $region25
    $region24: #{_fused_forward.1} parent=1 // pred_region
      %s2650 = ssub.s32 32, 32
      %2651 = vsyncadd [#allocation3], %s2650
      %s2653 = sshll.u32 [#allocation2], 4
      %s2654 = int_to_ptr.vmem [resolvable:$true] %s2653
      %2656 = dma.vmem_to_hbm [thread:$0]  %s2654, 32, %s5, [#allocation3]
    $region25: #{_fused_forward.1} parent=1 // pred_fallthru
      _
    // Predicated region
    $region26: #{_fused_forward.1} parent=1 // pred_check
      _
    $region27: #{_fused_forward.1} parent=1 // pred_check_branch
      %2658 = sbr.rel (0) target = $region29
    $region28: #{_fused_forward.1} parent=1 // pred_region
      %s2660 = ssub.s32 32, 32
      %2661 = vsyncadd [#allocation5], %s2660
      %s2663 = sshll.u32 [#allocation4], 4
      %s2664 = int_to_ptr.vmem [resolvable:$true] %s2663
      %2666 = dma.vmem_to_hbm [thread:$0]  %s2664, 32, %s6, [#allocation5]
    $region29: #{_fused_forward.1} parent=1 // pred_fallthru
      _
    // Predicated region
    $region30: #{_fused_forward.1} parent=1 // pred_check
      _
    $region31: #{_fused_forward.1} parent=1 // pred_check_branch
      %2668 = sbr.rel (0) target = $region33
    $region32: #{_fused_forward.1} parent=1 // pred_region
      %2669 = dma.done [#allocation3], 32
    $region33: #{_fused_forward.1} parent=1 // pred_fallthru
      _
    // Predicated region
    $region34: #{_fused_forward.1} parent=1 // pred_check
      _
    $region35: #{_fused_forward.1} parent=1 // pred_check_branch
      %2671 = sbr.rel (0) target = $region37
    $region36: #{_fused_forward.1} parent=1 // pred_region
      %2672 = dma.done [#allocation5], 32
    $region37: #{_fused_forward.1} parent=1 // pred_fallthru
      _
    %2673 = vsyncpa [#allocation3], 1
    %2674 = vsyncpa [#allocation5], 1

</llo_original>
